<compile_context>
chip_gen: v7x
topology: tpu7x:2x2x1
jax: 0.10.0
libtpu: 0.0.40
codegen_flags: <defaults>
</compile_context>

<pallas_src>
import functools

import jax
import jax.numpy as jnp
import numpy as np
from jax import lax
from jax.experimental import pallas as pl
from jax.experimental.pallas import tpu as pltpu


def _round_up(x, m):
    return (x + m - 1) // m * m


# ---------------------------------------------------------------------------
# VMEM budgeting (generation-aware)
# ---------------------------------------------------------------------------
def _vmem_plan():
    """Returns (tile_budget_bytes, vmem_limit_bytes) for the current chip."""
    cap = 0
    try:
        cap = int(pltpu.get_tpu_info().vmem_capacity_bytes)
    except Exception:
        cap = 0
    if cap <= 0:
        cap = 64 * 1024 * 1024                      # conservative (v7x per-TC)
    cap = min(max(cap, 32 * 1024 * 1024), 128 * 1024 * 1024)
    headroom = max(12 * 1024 * 1024, cap // 8)      # compiler temporaries etc.
    tile_budget = cap - headroom                    # ~112 MiB v5e/v6e, ~52 MiB v7x
    vmem_limit = cap - 4 * 1024 * 1024
    return tile_budget, vmem_limit


_TILE_CANDIDATES = (2048, 1024, 512, 256, 128, 64, 32, 16, 8)


def _select_k1_tile(S, Cp, budget):
    def k1_bytes(ts):
        x_in = 2 * ts * Cp * 4                       # x tile, double-buffered f32
        w = 2 * 3 * Cp * Cp * 2                      # fused W_qkv bf16
        outs = 3 * 2 * ts * Cp * 2                   # q/k/v out tiles bf16
        tmp = 2 * ts * Cp * 4                        # live f32 dot result + slack
        return x_in + w + outs + tmp

    for t in _TILE_CANDIDATES:
        if S % t == 0 and k1_bytes(t) <= budget:
            return t
    # TODO(synk): add a masked-tail path for awkward S; for now take the full
    # extent (legal) and assert it fits the budget.
    assert k1_bytes(S) <= budget, (
        "attn_block_pallas: qkv tile for S=%d, Cp=%d exceeds VMEM budget" % (S, Cp))
    return S


def _select_k2_tiles(B, S, Cp, budget):
    def k2_bytes(tq, tkv):
        x_o = 2 * 2 * tq * Cp * 4                    # x + out tiles, f32, 2-buf
        q = 2 * tq * Cp * 2                          # q tile bf16, 2-buf
        kv = 2 * 2 * tkv * Cp * 2                    # k + v tiles bf16, 2-buf
        wp = 2 * Cp * Cp * 2                         # proj weight bf16
        scr = tq * Cp * 4 + 2 * tq * 4               # acc + m + l scratch
        tmp = 3 * tq * tkv * 4                       # logits / p temporaries
        return x_o + q + kv + wp + scr + tmp

    candidates = [t for t in _TILE_CANDIDATES if S % t == 0] or [S]
    best = None
    for tq in candidates:
        for tkv in candidates:
            if k2_bytes(tq, tkv) > budget:
                continue
            # Keep >= 2 units of parallel work so both v7x TensorCores are busy.
            balanced = B * (S // tq) >= 2
            key = (balanced, tq, tkv)                # priority: balance > TQ > TKV
            if best is None or key > best[0]:
                best = (key, tq, tkv)
    if best is None:
        tq = tkv = min(candidates)
        assert k2_bytes(tq, tkv) <= budget, (
            "attn_block_pallas: no attention tiling fits VMEM budget "
            "(S=%d, Cp=%d)" % (S, Cp))
        return tq, tkv
    return best[1], best[2]


# ---------------------------------------------------------------------------
# Kernel 1: fused GroupNorm-apply + q/k/v 1x1-conv projection
# ---------------------------------------------------------------------------
def qkv_proj_kernel(x_ref, gns_ref, gnb_ref, wqkv_ref, bqkv_ref,
                    q_ref, k_ref, v_ref, *, attn_scale):
    """x_ref: (1, TS, Cp) f32; gns/gnb: (1, 1, Cp) f32 per-(batch,channel)
    scale/shift (mean/rstd/gamma/beta pre-folded; Identity branch => 1/0);
    wqkv_ref: (Cp, 3Cp) bf16; bqkv_ref: (1, 3Cp) f32.
    Outputs q (pre-scaled by C**-0.5), k, v: (1, TS, Cp) bf16."""
    cp = q_ref.shape[-1]
    h = (x_ref[0] * gns_ref[0] + gnb_ref[0]).astype(jnp.bfloat16)        # (TS, Cp)

    # Three (TS, Cp) dots instead of one (TS, 3Cp) dot: same MXU work, but the
    # live f32 intermediate stays at (TS, Cp) (v7x VMEM pressure).
    def proj(i):
        w = wqkv_ref[:, i * cp:(i + 1) * cp]
        b = bqkv_ref[:, i * cp:(i + 1) * cp]
        return jnp.dot(h, w, preferred_element_type=jnp.float32) + b

    q_ref[0] = (proj(0) * attn_scale).astype(jnp.bfloat16)
    k_ref[0] = proj(1).astype(jnp.bfloat16)
    v_ref[0] = proj(2).astype(jnp.bfloat16)


# ---------------------------------------------------------------------------
# Kernel 2: flash attention (online softmax) + output projection + residual
# ---------------------------------------------------------------------------
def flash_attn_kernel(x_ref, q_ref, k_ref, v_ref, wp_ref, bp_ref, o_ref,
                      m_sc, l_sc, acc_sc):
    """x_ref/o_ref: (1, TQ, Cp) f32; q_ref: (1, TQ, Cp) bf16;
    k_ref/v_ref: (1, TKV, Cp) bf16; wp_ref: (Cp, Cp) bf16; bp_ref: (1, Cp) f32.
    Scratch: m_sc/l_sc (TQ, 1) f32, acc_sc (TQ, Cp) f32."""
    ki = pl.program_id(2)

    @pl.when(ki == 0)
    def _():
        m_sc[...] = jnp.full(m_sc.shape, -jnp.inf, jnp.float32)
        l_sc[...] = jnp.zeros(l_sc.shape, jnp.float32)
        acc_sc[...] = jnp.zeros(acc_sc.shape, jnp.float32)

    q = q_ref[0]          # (TQ, Cp) bf16, already scaled by C**-0.5
    k = k_ref[0]          # (TKV, Cp) bf16
    v = v_ref[0]          # (TKV, Cp) bf16

    # logits: contract channel dims directly (no explicit k.T transpose)
    s = lax.dot_general(q, k, dimension_numbers=(((1,), (1,)), ((), ())),
                        preferred_element_type=jnp.float32)              # (TQ, TKV)

    m_prev = m_sc[...]
    m_new = jnp.maximum(m_prev, jnp.max(s, axis=-1, keepdims=True))
    alpha = jnp.exp(m_prev - m_new)
    p = jnp.exp(s - m_new)                                               # (TQ, TKV) f32
    l_sc[...] = alpha * l_sc[...] + jnp.sum(p, axis=-1, keepdims=True)
    acc_sc[...] = alpha * acc_sc[...] + jnp.dot(
        p.astype(jnp.bfloat16), v, preferred_element_type=jnp.float32)
    m_sc[...] = m_new

    @pl.when(ki == pl.num_programs(2) - 1)
    def _():
        att = acc_sc[...] * pl.reciprocal(l_sc[...], approx=True)        # (TQ, Cp) f32
        proj = jnp.dot(att.astype(jnp.bfloat16), wp_ref[...],
                       preferred_element_type=jnp.float32) + bp_ref[...]
        o_ref[0] = x_ref[0] + proj


# ---------------------------------------------------------------------------
# Weight preprocessing (hoisted: call once, reuse every forward)
# ---------------------------------------------------------------------------
def prepare_params(params, C):
    """params = (wq, bq, wk, bk, wv, bv, wp, bp), w*: (C_out, C_in), b*: (C,)."""
    wq, bq, wk, bk, wv, bv, wp, bp = params
    Cp = _round_up(max(C, 128), 128)
    pad_c = Cp - C

    def pad_w(w):  # (Cout, Cin) -> transposed + zero-padded (Cp, Cp), bf16
        return jnp.pad(jnp.transpose(w), ((0, pad_c), (0, pad_c))).astype(jnp.bfloat16)

    def pad_b(b):
        return jnp.pad(b, ((0, pad_c),)).reshape(1, Cp).astype(jnp.float32)

    wqkv = jnp.concatenate([pad_w(wq), pad_w(wk), pad_w(wv)], axis=1)    # (Cp, 3Cp)
    bqkv = jnp.concatenate([pad_b(bq), pad_b(bk), pad_b(bv)], axis=1)    # (1, 3Cp)
    return {"wqkv": wqkv, "bqkv": bqkv, "wp_t": pad_w(wp), "bp": pad_b(bp),
            "C": C, "Cp": Cp}


# ---------------------------------------------------------------------------
# Wrapper
# ---------------------------------------------------------------------------
def attn_block_pallas(x_nchw, params=None, gn_params=None, prepared=None,
                      out_layout="NCHW"):
    """params = (wq, bq, wk, bk, wv, bv, wp, bp); gn_params = (gamma, beta) for
    the GroupNorm affine (only used when C >= 32).  Pass `prepared` from
    prepare_params() to skip per-call weight preprocessing."""
    B, C, H, W = x_nchw.shape
    S = H * W
    if prepared is None:
        prepared = prepare_params(params, C)
    Cp = prepared["Cp"]
    pad_c = Cp - C
    # NOTE: for C << 128 the Cp=128 padding wastes >90% of MXU-K / HBM traffic;
    # an un-padded XLA einsum path would win there.  Kept on the Pallas path so
    # the kernel is exercised for all sizes.

    # --- GroupNorm statistics in plain JAX (tiny: B x 32 scalars).  The
    # normalize + affine is applied inside qkv_proj_kernel via per-(b, c)
    # scale/shift, so the normalized tensor h never touches HBM.
    if C >= 32:
        g = 32
        xr = x_nchw.reshape(B, g, C // g, S).astype(jnp.float32)
        mean_g = jnp.mean(xr, axis=(2, 3))                               # (B, g)
        var_g = jnp.var(xr, axis=(2, 3))                                 # (B, g)
        rstd_g = lax.rsqrt(var_g + 1e-5)
        mean_c = jnp.repeat(mean_g, C // g, axis=1)                      # (B, C)
        rstd_c = jnp.repeat(rstd_g, C // g, axis=1)
        if gn_params is not None:
            gamma, beta = gn_params
            gamma = gamma.astype(jnp.float32)
            beta = beta.astype(jnp.float32)
        else:
            gamma = jnp.ones((C,), jnp.float32)
            beta = jnp.zeros((C,), jnp.float32)
        gn_scale = rstd_c * gamma[None, :]
        gn_shift = beta[None, :] - mean_c * gn_scale
    else:
        # nn.Identity() branch of the PyTorch module.
        gn_scale = jnp.ones((B, C), jnp.float32)
        gn_shift = jnp.zeros((B, C), jnp.float32)

    x = jnp.transpose(x_nchw, (0, 2, 3, 1)).reshape(B, S, C).astype(jnp.float32)
    if pad_c:
        x = jnp.pad(x, ((0, 0), (0, 0), (0, pad_c)))
        gn_scale = jnp.pad(gn_scale, ((0, 0), (0, pad_c)))
        gn_shift = jnp.pad(gn_shift, ((0, 0), (0, pad_c)))
    gn_scale = gn_scale.reshape(B, 1, Cp)
    gn_shift = gn_shift.reshape(B, 1, Cp)

    tile_budget, vmem_limit = _vmem_plan()
    attn_scale = float(C) ** (-0.5)

    # ---- kernel 1: fused GroupNorm-apply + qkv projection ----
    TS = _select_k1_tile(S, Cp, tile_budget)
    q, k, v = pl.pallas_call(
        functools.partial(qkv_proj_kernel, attn_scale=attn_scale),
        out_shape=(jax.ShapeDtypeStruct((B, S, Cp), jnp.bfloat16),) * 3,
        grid=(B, S // TS),
        in_specs=[
            pl.BlockSpec((1, TS, Cp), lambda b, i: (b, i, 0)),           # x
            pl.BlockSpec((1, 1, Cp), lambda b, i: (b, 0, 0)),            # gn scale
            pl.BlockSpec((1, 1, Cp), lambda b, i: (b, 0, 0)),            # gn shift
            pl.BlockSpec((Cp, 3 * Cp), lambda b, i: (0, 0)),             # W_qkv
            pl.BlockSpec((1, 3 * Cp), lambda b, i: (0, 0)),              # b_qkv
        ],
        out_specs=(pl.BlockSpec((1, TS, Cp), lambda b, i: (b, i, 0)),) * 3,
        compiler_params=pltpu.CompilerParams(
            dimension_semantics=("parallel", "parallel"),
            vmem_limit_bytes=vmem_limit),
    )(x, gn_scale, gn_shift, prepared["wqkv"], prepared["bqkv"])

    # ---- kernel 2: flash attention + output projection + residual ----
    TQ, TKV = _select_k2_tiles(B, S, Cp, tile_budget)
    out = pl.pallas_call(
        flash_attn_kernel,
        out_shape=jax.ShapeDtypeStruct((B, S, Cp), jnp.float32),
        grid=(B, S // TQ, S // TKV),
        in_specs=[
            pl.BlockSpec((1, TQ, Cp), lambda b, qi, ki: (b, qi, 0)),     # x (residual)
            pl.BlockSpec((1, TQ, Cp), lambda b, qi, ki: (b, qi, 0)),     # q
            pl.BlockSpec((1, TKV, Cp), lambda b, qi, ki: (b, ki, 0)),    # k
            pl.BlockSpec((1, TKV, Cp), lambda b, qi, ki: (b, ki, 0)),    # v
            pl.BlockSpec((Cp, Cp), lambda b, qi, ki: (0, 0)),            # wp
            pl.BlockSpec((1, Cp), lambda b, qi, ki: (0, 0)),             # bp
        ],
        out_specs=pl.BlockSpec((1, TQ, Cp), lambda b, qi, ki: (b, qi, 0)),
        scratch_shapes=[
            pltpu.VMEM((TQ, 1), jnp.float32),    # running max m
            pltpu.VMEM((TQ, 1), jnp.float32),    # running sum l
            pltpu.VMEM((TQ, Cp), jnp.float32),   # accumulator
        ],
        compiler_params=pltpu.CompilerParams(
            dimension_semantics=("parallel", "parallel", "arbitrary"),
            vmem_limit_bytes=vmem_limit),
    )(x, q, k, v, prepared["wp_t"], prepared["bp"])

    out = out[:, :, :C].reshape(B, H, W, C)
    if out_layout == "NHWC":
        return out                                   # skip the layout round-trip
    return jnp.transpose(out, (0, 3, 1, 2))


# ---------------------------------------------------------------------------
# Parameter init (matches the PyTorch module's initialize())
# ---------------------------------------------------------------------------
def init_params(key, C):
    """xavier_uniform_ on q/k/v weights (gain=1), proj weight gain=1e-5, biases zero."""
    def xavier_uniform(k, gain):
        bound = gain * np.sqrt(6.0 / (C + C))   # conv (C, C, 1, 1): fan_in = fan_out = C
        return jax.random.uniform(k, (C, C), jnp.float32, -bound, bound)

    kq, kk, kv, kp = jax.random.split(key, 4)
    wq = xavier_uniform(kq, 1.0)
    wk = xavier_uniform(kk, 1.0)
    wv = xavier_uniform(kv, 1.0)
    wp = xavier_uniform(kp, 1e-5)
    zeros = jnp.zeros((C,), jnp.float32)
    return (wq, zeros, wk, zeros, wv, zeros, wp, zeros)


# ---------------------------------------------------------------------------
# Plain-JAX reference (mirrors the PyTorch forward) for verification
# ---------------------------------------------------------------------------
def attn_block_reference(x_nchw, params, gn_params=None):
    B, C, H, W = x_nchw.shape
    wq, bq, wk, bk, wv, bv, wp, bp = params
    h = x_nchw
    if C >= 32:
        g = 32
        xr = x_nchw.reshape(B, g, C // g, H, W)
        mean = jnp.mean(xr, axis=(2, 3, 4), keepdims=True)
        var = jnp.var(xr, axis=(2, 3, 4), keepdims=True)
        h = ((xr - mean) / jnp.sqrt(var + 1e-5)).reshape(B, C, H, W)
        if gn_params is not None:
            gamma, beta = gn_params
            h = h * gamma[None, :, None, None] + beta[None, :, None, None]

    def conv1x1(t, w, b):  # t: (B, C, H, W), w: (Cout, Cin)
        return jnp.einsum('oc,bchw->bohw', w, t) + b[None, :, None, None]

    q = conv1x1(h, wq, bq)
    k = conv1x1(h, wk, bk)
    v = conv1x1(h, wv, bv)
    q = jnp.transpose(q, (0, 2, 3, 1)).reshape(B, H * W, C)
    k = k.reshape(B, C, H * W)
    w = jnp.einsum('bsc,bct->bst', q, k) * (C ** -0.5)
    w = jax.nn.softmax(w, axis=-1)
    v = jnp.transpose(v, (0, 2, 3, 1)).reshape(B, H * W, C)
    o = jnp.einsum('bst,btc->bsc', w, v)
    o = jnp.transpose(o.reshape(B, H, W, C), (0, 3, 1, 2))
    o = conv1x1(o, wp, bp)
    return x_nchw + o


if __name__ == "__main__":
    key = jax.random.PRNGKey(0)
    kx1, kp1, kx2, kp2, kg = jax.random.split(key, 5)

    # Case 1: C < 32 -> group_norm is nn.Identity()
    B, C, H, W = 2, 4, 16, 16
    x = jax.random.normal(kx1, (B, C, H, W), jnp.float32)
    params = init_params(kp1, C)
    prepared = prepare_params(params, C)      # hoisted weight preprocessing
    out = jax.block_until_ready(attn_block_pallas(x, params, prepared=prepared))
    ref = attn_block_reference(x, params)
    np.testing.assert_allclose(np.asarray(out), np.asarray(ref), rtol=2e-3, atol=2e-3)

    # Case 2: C >= 32 -> GroupNorm(32, C) fused into the qkv kernel
    B2, C2, H2, W2 = 2, 64, 8, 8
    x2 = jax.random.normal(kx2, (B2, C2, H2, W2), jnp.float32)
    params2 = init_params(kp2, C2)
    gamma = 1.0 + 0.1 * jax.random.normal(kg, (C2,), jnp.float32)
    beta = 0.1 * jax.random.normal(jax.random.fold_in(kg, 1), (C2,), jnp.float32)
    out2 = jax.block_until_ready(
        attn_block_pallas(x2, params2, gn_params=(gamma, beta)))
    ref2 = attn_block_reference(x2, params2, gn_params=(gamma, beta))
    np.testing.assert_allclose(np.asarray(out2), np.asarray(ref2), rtol=2e-3, atol=2e-3)

    print("KERNEL_OK")
</pallas_src>

<mosaic_0001>
module attributes {stable_mosaic.version = 11 : i64} {
  func.func @qkv_proj_kernel(%arg0: i32, %arg1: i32, %arg2: memref<1x256x128xf32, #tpu.memory_space<vmem>>, %arg3: memref<1x1x128xf32, #tpu.memory_space<vmem>>, %arg4: memref<1x1x128xf32, #tpu.memory_space<vmem>>, %arg5: memref<128x384xbf16, #tpu.memory_space<vmem>>, %arg6: memref<1x384xf32, #tpu.memory_space<vmem>>, %arg7: memref<1x256x128xbf16, #tpu.memory_space<vmem>>, %arg8: memref<1x256x128xbf16, #tpu.memory_space<vmem>>, %arg9: memref<1x256x128xbf16, #tpu.memory_space<vmem>>) attributes {dimension_semantics = [#tpu.dimension_semantics<parallel>, #tpu.dimension_semantics<parallel>], iteration_bounds = array<i64: 2, 1>, scalar_prefetch = 0 : i64, scratch_operands = 0 : i64, tpu.core_type = #tpu.core_type<tc>, window_params = [{transform_indices = @transform_0, window_bounds = array<i64: 1, 256, 128>}, {transform_indices = @transform_1, window_bounds = array<i64: 1, 1, 128>}, {transform_indices = @transform_2, window_bounds = array<i64: 1, 1, 128>}, {pipeline_mode = #tpu.pipeline_mode<synchronous>, transform_indices = @transform_3, window_bounds = array<i64: 128, 384>}, {pipeline_mode = #tpu.pipeline_mode<synchronous>, transform_indices = @transform_4, window_bounds = array<i64: 1, 384>}, {transform_indices = @transform_5, window_bounds = array<i64: 1, 256, 128>}, {transform_indices = @transform_6, window_bounds = array<i64: 1, 256, 128>}, {transform_indices = @transform_7, window_bounds = array<i64: 1, 256, 128>}]} {
    %c0 = arith.constant 0 : index
    %c0_0 = arith.constant 0 : index
    %c0_1 = arith.constant 0 : index
    %0 = vector.load %arg2[%c0, %c0_0, %c0_1] : memref<1x256x128xf32, #tpu.memory_space<vmem>>, vector<1x256x128xf32>
    %1 = vector.shape_cast %0 : vector<1x256x128xf32> to vector<256x128xf32>
    %c0_2 = arith.constant 0 : index
    %c0_3 = arith.constant 0 : index
    %c0_4 = arith.constant 0 : index
    %2 = vector.load %arg3[%c0_2, %c0_3, %c0_4] : memref<1x1x128xf32, #tpu.memory_space<vmem>>, vector<1x1x128xf32>
    %3 = vector.shape_cast %2 : vector<1x1x128xf32> to vector<1x128xf32>
    %4 = vector.broadcast %3 : vector<1x128xf32> to vector<256x128xf32>
    %5 = arith.mulf %1, %4 : vector<256x128xf32>
    %c0_5 = arith.constant 0 : index
    %c0_6 = arith.constant 0 : index
    %c0_7 = arith.constant 0 : index
    %6 = vector.load %arg4[%c0_5, %c0_6, %c0_7] : memref<1x1x128xf32, #tpu.memory_space<vmem>>, vector<1x1x128xf32>
    %7 = vector.shape_cast %6 : vector<1x1x128xf32> to vector<1x128xf32>
    %8 = vector.broadcast %7 : vector<1x128xf32> to vector<256x128xf32>
    %9 = arith.addf %5, %8 : vector<256x128xf32>
    %10 = arith.truncf %9 : vector<256x128xf32> to vector<256x128xbf16>
    %c0_8 = arith.constant 0 : index
    %c0_9 = arith.constant 0 : index
    %11 = vector.load %arg5[%c0_8, %c0_9] : memref<128x384xbf16, #tpu.memory_space<vmem>>, vector<128x128xbf16>
    %c0_10 = arith.constant 0 : index
    %c0_11 = arith.constant 0 : index
    %12 = vector.load %arg6[%c0_10, %c0_11] : memref<1x384xf32, #tpu.memory_space<vmem>>, vector<1x128xf32>
    %cst = arith.constant dense<0.000000e+00> : vector<256x128xf32>
    %13 = tpu.matmul %10, %11, %cst {dimension_numbers = #tpu.dot_dimension_numbers<[1], [0], [0], [1], [0, 0, 1, 1], [], []>} : vector<256x128xbf16>, vector<128x128xbf16>, vector<256x128xf32> -> vector<256x128xf32>
    %14 = vector.broadcast %12 : vector<1x128xf32> to vector<256x128xf32>
    %15 = arith.addf %13, %14 : vector<256x128xf32>
    %cst_12 = arith.constant 5.000000e-01 : f32
    %16 = vector.broadcast %cst_12 : f32 to vector<256x128xf32>
    %17 = arith.mulf %15, %16 : vector<256x128xf32>
    %18 = arith.truncf %17 : vector<256x128xf32> to vector<256x128xbf16>
    %c0_13 = arith.constant 0 : index
    %c0_14 = arith.constant 0 : index
    %c0_15 = arith.constant 0 : index
    %19 = vector.load %arg7[%c0_13, %c0_14, %c0_15] : memref<1x256x128xbf16, #tpu.memory_space<vmem>>, vector<1x256x128xbf16>
    %20 = vector.shape_cast %19 : vector<1x256x128xbf16> to vector<256x128xbf16>
    %21 = vector.shape_cast %18 : vector<256x128xbf16> to vector<1x256x128xbf16>
    tpu.vector_store %arg7[%c0_13, %c0_14, %c0_15], %21 {strides = array<i32>} : memref<1x256x128xbf16, #tpu.memory_space<vmem>>, vector<1x256x128xbf16>,
    %c0_16 = arith.constant 0 : index
    %c128 = arith.constant 128 : index
    %22 = vector.load %arg5[%c0_16, %c128] : memref<128x384xbf16, #tpu.memory_space<vmem>>, vector<128x128xbf16>
    %c0_17 = arith.constant 0 : index
    %c128_18 = arith.constant 128 : index
    %23 = vector.load %arg6[%c0_17, %c128_18] : memref<1x384xf32, #tpu.memory_space<vmem>>, vector<1x128xf32>
    %cst_19 = arith.constant dense<0.000000e+00> : vector<256x128xf32>
    %24 = tpu.matmul %10, %22, %cst_19 {dimension_numbers = #tpu.dot_dimension_numbers<[1], [0], [0], [1], [0, 0, 1, 1], [], []>} : vector<256x128xbf16>, vector<128x128xbf16>, vector<256x128xf32> -> vector<256x128xf32>
    %25 = vector.broadcast %23 : vector<1x128xf32> to vector<256x128xf32>
    %26 = arith.addf %24, %25 : vector<256x128xf32>
    %27 = arith.truncf %26 : vector<256x128xf32> to vector<256x128xbf16>
    %c0_20 = arith.constant 0 : index
    %c0_21 = arith.constant 0 : index
    %c0_22 = arith.constant 0 : index
    %28 = vector.load %arg8[%c0_20, %c0_21, %c0_22] : memref<1x256x128xbf16, #tpu.memory_space<vmem>>, vector<1x256x128xbf16>
    %29 = vector.shape_cast %28 : vector<1x256x128xbf16> to vector<256x128xbf16>
    %30 = vector.shape_cast %27 : vector<256x128xbf16> to vector<1x256x128xbf16>
    tpu.vector_store %arg8[%c0_20, %c0_21, %c0_22], %30 {strides = array<i32>} : memref<1x256x128xbf16, #tpu.memory_space<vmem>>, vector<1x256x128xbf16>,
    %c0_23 = arith.constant 0 : index
    %c256 = arith.constant 256 : index
    %31 = vector.load %arg5[%c0_23, %c256] : memref<128x384xbf16, #tpu.memory_space<vmem>>, vector<128x128xbf16>
    %c0_24 = arith.constant 0 : index
    %c256_25 = arith.constant 256 : index
    %32 = vector.load %arg6[%c0_24, %c256_25] : memref<1x384xf32, #tpu.memory_space<vmem>>, vector<1x128xf32>
    %cst_26 = arith.constant dense<0.000000e+00> : vector<256x128xf32>
    %33 = tpu.matmul %10, %31, %cst_26 {dimension_numbers = #tpu.dot_dimension_numbers<[1], [0], [0], [1], [0, 0, 1, 1], [], []>} : vector<256x128xbf16>, vector<128x128xbf16>, vector<256x128xf32> -> vector<256x128xf32>
    %34 = vector.broadcast %32 : vector<1x128xf32> to vector<256x128xf32>
    %35 = arith.addf %33, %34 : vector<256x128xf32>
    %36 = arith.truncf %35 : vector<256x128xf32> to vector<256x128xbf16>
    %c0_27 = arith.constant 0 : index
    %c0_28 = arith.constant 0 : index
    %c0_29 = arith.constant 0 : index
    %37 = vector.load %arg9[%c0_27, %c0_28, %c0_29] : memref<1x256x128xbf16, #tpu.memory_space<vmem>>, vector<1x256x128xbf16>
    %38 = vector.shape_cast %37 : vector<1x256x128xbf16> to vector<256x128xbf16>
    %39 = vector.shape_cast %36 : vector<256x128xbf16> to vector<1x256x128xbf16>
    tpu.vector_store %arg9[%c0_27, %c0_28, %c0_29], %39 {strides = array<i32>} : memref<1x256x128xbf16, #tpu.memory_space<vmem>>, vector<1x256x128xbf16>,
    return
  }
  func.func @transform_0(%arg0: i32, %arg1: i32) -> (i32, i32, i32) {
    %c0_i32 = arith.constant 0 : i32
    %c0_i32_0 = arith.constant 0 : i32
    return %arg0, %arg1, %c0_i32 : i32, i32, i32
  }
  func.func @transform_1(%arg0: i32, %arg1: i32) -> (i32, i32, i32) {
    %c0_i32 = arith.constant 0 : i32
    %c0_i32_0 = arith.constant 0 : i32
    %c0_i32_1 = arith.constant 0 : i32
    return %arg0, %c0_i32, %c0_i32_0 : i32, i32, i32
  }
  func.func @transform_2(%arg0: i32, %arg1: i32) -> (i32, i32, i32) {
    %c0_i32 = arith.constant 0 : i32
    %c0_i32_0 = arith.constant 0 : i32
    %c0_i32_1 = arith.constant 0 : i32
    return %arg0, %c0_i32, %c0_i32_0 : i32, i32, i32
  }
  func.func @transform_3(%arg0: i32, %arg1: i32) -> (i32, i32) {
    %c0_i32 = arith.constant 0 : i32
    %c0_i32_0 = arith.constant 0 : i32
    %c0_i32_1 = arith.constant 0 : i32
    return %c0_i32, %c0_i32_0 : i32, i32
  }
  func.func @transform_4(%arg0: i32, %arg1: i32) -> (i32, i32) {
    %c0_i32 = arith.constant 0 : i32
    %c0_i32_0 = arith.constant 0 : i32
    %c0_i32_1 = arith.constant 0 : i32
    return %c0_i32, %c0_i32_0 : i32, i32
  }
  func.func @transform_5(%arg0: i32, %arg1: i32) -> (i32, i32, i32) {
    %c0_i32 = arith.constant 0 : i32
    %c0_i32_0 = arith.constant 0 : i32
    return %arg0, %arg1, %c0_i32 : i32, i32, i32
  }
  func.func @transform_6(%arg0: i32, %arg1: i32) -> (i32, i32, i32) {
    %c0_i32 = arith.constant 0 : i32
    %c0_i32_0 = arith.constant 0 : i32
    return %arg0, %arg1, %c0_i32 : i32, i32, i32
  }
  func.func @transform_7(%arg0: i32, %arg1: i32) -> (i32, i32, i32) {
    %c0_i32 = arith.constant 0 : i32
    %c0_i32_0 = arith.constant 0 : i32
    return %arg0, %arg1, %c0_i32 : i32, i32, i32
  }
}

</mosaic_0001>

<llo_original>
// kernel: tpu_custom_call.1
$region0: #{tpu_custom_call.1}
  #allocation0 [shape = 'u32[]', space=smem, size = 0x4, offset = 0x4, fixed_abs, tag = 'smem constant byte address 0x4 - core index']
  #allocation1 [shape = 'u32[144,128]{1,0:T(1,128)}', space=vmem, size = 0x12000, scoped, tag = 'internal scratch']
  %s0 = inlined_call_operand.hbm [shape: f32[2,256,128], index: 0, kind: input, shape index: {}]
  %s1 = inlined_call_operand.vmem [shape: f32[2,1,128], index: 1, kind: input, shape index: {}]
  %s2 = inlined_call_operand.vmem [shape: f32[2,1,128], index: 2, kind: input, shape index: {}]
  %s3 = inlined_call_operand.hbm [shape: bf16[128,384], index: 3, kind: input, shape index: {}]
  %s4 = inlined_call_operand.vmem [shape: f32[1,384], index: 4, kind: input, shape index: {}]
  %s5 = inlined_call_operand.hbm [shape: bf16[2,256,128], index: 5, kind: output, shape index: {0}]
  %s6 = inlined_call_operand.hbm [shape: bf16[2,256,128], index: 6, kind: output, shape index: {1}]
  %s7 = inlined_call_operand.hbm [shape: bf16[2,256,128], index: 7, kind: output, shape index: {2}]
  %8 = xla_tuple %s5, %s6, %s7
  %s9 = sld [smem:[#allocation0]]
  $region77: #{tpu_custom_call.1} parent=0
    _
  %s11 = ssub.s32 1, %s9
  %s12 = scalar_select 0, %s11, %s9
  $region1: #{tpu_custom_call.1} parent=0
    #allocation2 [shape = 'u8[262144]{0}', space=vmem, size = 0x40000, scoped, tag = 'input window, operand 0']
    #allocation3 [shape = 's32[2]{0}', space=sflag, size = 0x8, scoped, tag = 'scoped memory for tpu_custom_call.1']
    #allocation4 [shape = 's32[2]{0}', space=sflag, size = 0x8, scoped, tag = 'scoped memory for tpu_custom_call.1']
    #allocation5 [shape = 'u8[98304]{0}', space=vmem, size = 0x18000, scoped, tag = 'input window, operand 3, single buffered']
    #allocation6 [shape = 's32[1]{0}', space=sflag, size = 0x4, scoped, tag = 'scoped memory for tpu_custom_call.1']
    #allocation7 [shape = 'u8[131072]{0}', space=vmem, size = 0x20000, scoped, tag = 'output window, operand 0']
    #allocation8 [shape = 'u8[131072]{0}', space=vmem, size = 0x20000, scoped, tag = 'output window, operand 1']
    #allocation9 [shape = 's32[2]{0}', space=sflag, size = 0x8, scoped, tag = 'scoped memory for tpu_custom_call.1']
    #allocation10 [shape = 'u8[131072]{0}', space=vmem, size = 0x20000, scoped, tag = 'output window, operand 2']
    %13 = vsyncpa [#allocation3], 0
    %s14 = scalar_lea.sflag [#allocation3], 1
    %15 = vsyncpa %s14, 0
    %16 = vsyncpa [#allocation6], 0
    %17 = vsyncpa [#allocation4], 0
    %s18 = scalar_lea.sflag [#allocation4], 1
    %19 = vsyncpa %s18, 0
    %20 = vsyncpa [#allocation9], 0
    %s21 = scalar_lea.sflag [#allocation9], 1
    %22 = vsyncpa %s21, 0
    loop: start=0, step=1, limit=4
    $region2: #{tpu_custom_call.1} parent=1 // loop_pre_header
      _
    $region3: #{tpu_custom_call.1} parent=1 // loop_header
      %s24 = sphi 0, %s28
      %p25 = scmp.ge.s32.totalorder %s24, 4
      %s31 = sphi 0, %s43
      %s32 = sphi 0, %s39
      %s33 = sphi 0, %s31
      %s34 = sphi 0, %s32
      %s35 = sphi 0, %s33
      %s36 = sphi 0, %s34
      %s48 = sphi 0, %s50
      %s51 = sphi 0, %s48
      %s52 = sphi 0, %s51
      %s68 = sphi 0, %s52
      %s74 = sphi 0, %s76
      %s77 = sphi 0, %s74
      %s78 = sphi 0, %s77
      %s94 = sphi 0, %s78
      %s100 = sphi 0, %s102
      %s103 = sphi 0, %s100
      %s104 = sphi 0, %s103
      %s120 = sphi 0, %s104
      %s124 = sphi 0, %s124
      %s126 = sphi 0, %s124
      %s127 = sphi 0, %s126
      %s141 = sphi 0, %s127
      %s145 = sphi 0, %s145
      %s147 = sphi 0, %s145
      %s148 = sphi 0, %s147
      %s162 = sphi 0, %s148
      %s170 = sphi 0, %s172
      %s173 = sphi 0, %s170
      %s174 = sphi 0, %s173
      %s190 = sphi 0, %s174
      %s198 = sphi 0, %s200
      %s201 = sphi 0, %s198
      %s202 = sphi 0, %s201
      %s218 = sphi 0, %s202
      %s226 = sphi 0, %s228
      %s229 = sphi 0, %s226
      %s230 = sphi 0, %s229
      %s246 = sphi 0, %s230
    $region4: #{tpu_custom_call.1} parent=1 // loop_header_branch
      %27 = sbr.rel (%p25) target = $region8
    $region5: #{tpu_custom_call.1} parent=1 // loop_body
      %s29 = ssub.s32 %s24, 1
      %s30 = ssub.s32 %s24, 2
      %s37 = sadd.s32 1, %s32
      %p38 = scmp.ge.s32.totalorder %s37, 1
      %s39 = scalar_select %p38, 0, %s37
      %s40 = sadd.s32 1, %s31
      %s41 = scalar_select %p38, %s40, %s31
      %p42 = scmp.ge.s32.totalorder %s41, 2
      %s43 = scalar_select %p42, 0, %s41
      %s44 = ssub.s32 %s31, %s43
      %s45 = ssub.s32 %s32, %s39
      %s46 = sor.u32 %s44, %s45
      %p47 = scmp.eq.s32.totalorder %s46, 0
      %s49 = sadd.s32 %s48, 1
      %s50 = scalar_select %p47, %s48, %s49
      %p53 = pneg %p47
      %p54 = scmp.eq.s32.totalorder %s24, 1
      %p55 = por %p53, %p54
      %p56 = scmp.ne.s32.totalorder %s48, %s51
      %p57 = scmp.eq.s32.totalorder %s24, 0
      %p58 = por %p56, %p57
      %p59 = scmp.ne.s32.totalorder %s48, %s51
      %p60 = scmp.eq.s32.totalorder %s29, 1
      %p61 = por %p59, %p60
      %p62 = scmp.ne.s32.totalorder %s51, %s52
      %p63 = scmp.eq.s32.totalorder %s29, 0
      %p64 = por %p62, %p63
      %p65 = scmp.ne.s32.totalorder %s51, %s52
      %p66 = scmp.eq.s32.totalorder %s30, 1
      %p67 = por %p65, %p66
      %p69 = scmp.ne.s32.totalorder %s52, %s68
      %p70 = scmp.eq.s32.totalorder %s30, 0
      %p71 = por %p69, %p70
      %s72 = ssub.s32 %s31, %s43
      %p73 = scmp.eq.s32.totalorder %s72, 0
      %s75 = sadd.s32 %s74, 1
      %s76 = scalar_select %p73, %s74, %s75
      %p79 = pneg %p73
      %p80 = scmp.eq.s32.totalorder %s24, 1
      %p81 = por %p79, %p80
      %p82 = scmp.ne.s32.totalorder %s74, %s77
      %p83 = scmp.eq.s32.totalorder %s24, 0
      %p84 = por %p82, %p83
      %p85 = scmp.ne.s32.totalorder %s74, %s77
      %p86 = scmp.eq.s32.totalorder %s29, 1
      %p87 = por %p85, %p86
      %p88 = scmp.ne.s32.totalorder %s77, %s78
      %p89 = scmp.eq.s32.totalorder %s29, 0
      %p90 = por %p88, %p89
      %p91 = scmp.ne.s32.totalorder %s77, %s78
      %p92 = scmp.eq.s32.totalorder %s30, 1
      %p93 = por %p91, %p92
      %p95 = scmp.ne.s32.totalorder %s78, %s94
      %p96 = scmp.eq.s32.totalorder %s30, 0
      %p97 = por %p95, %p96
      %s98 = ssub.s32 %s31, %s43
      %p99 = scmp.eq.s32.totalorder %s98, 0
      %s101 = sadd.s32 %s100, 1
      %s102 = scalar_select %p99, %s100, %s101
      %p105 = pneg %p99
      %p106 = scmp.eq.s32.totalorder %s24, 1
      %p107 = por %p105, %p106
      %p108 = scmp.ne.s32.totalorder %s100, %s103
      %p109 = scmp.eq.s32.totalorder %s24, 0
      %p110 = por %p108, %p109
      %p111 = scmp.ne.s32.totalorder %s100, %s103
      %p112 = scmp.eq.s32.totalorder %s29, 1
      %p113 = por %p111, %p112
      %p114 = scmp.ne.s32.totalorder %s103, %s104
      %p115 = scmp.eq.s32.totalorder %s29, 0
      %p116 = por %p114, %p115
      %p117 = scmp.ne.s32.totalorder %s103, %s104
      %p118 = scmp.eq.s32.totalorder %s30, 1
      %p119 = por %p117, %p118
      %p121 = scmp.ne.s32.totalorder %s104, %s120
      %p122 = scmp.eq.s32.totalorder %s30, 0
      %p123 = por %p121, %p122
      %s125 = sadd.s32 %s124, 1
      %p128 = scmp.eq.s32.totalorder %s24, 1
      %p129 = scmp.ne.s32.totalorder %s124, %s126
      %p130 = scmp.eq.s32.totalorder %s24, 0
      %p131 = por %p129, %p130
      %p132 = scmp.ne.s32.totalorder %s124, %s126
      %p133 = scmp.eq.s32.totalorder %s29, 1
      %p134 = por %p132, %p133
      %p135 = scmp.ne.s32.totalorder %s126, %s127
      %p136 = scmp.eq.s32.totalorder %s29, 0
      %p137 = por %p135, %p136
      %p138 = scmp.ne.s32.totalorder %s126, %s127
      %p139 = scmp.eq.s32.totalorder %s30, 1
      %p140 = por %p138, %p139
      %p142 = scmp.ne.s32.totalorder %s127, %s141
      %p143 = scmp.eq.s32.totalorder %s30, 0
      %p144 = por %p142, %p143
      %s146 = sadd.s32 %s145, 1
      %p149 = scmp.eq.s32.totalorder %s24, 1
      %p150 = scmp.ne.s32.totalorder %s145, %s147
      %p151 = scmp.eq.s32.totalorder %s24, 0
      %p152 = por %p150, %p151
      %p153 = scmp.ne.s32.totalorder %s145, %s147
      %p154 = scmp.eq.s32.totalorder %s29, 1
      %p155 = por %p153, %p154
      %p156 = scmp.ne.s32.totalorder %s147, %s148
      %p157 = scmp.eq.s32.totalorder %s29, 0
      %p158 = por %p156, %p157
      %p159 = scmp.ne.s32.totalorder %s147, %s148
      %p160 = scmp.eq.s32.totalorder %s30, 1
      %p161 = por %p159, %p160
      %p163 = scmp.ne.s32.totalorder %s148, %s162
      %p164 = scmp.eq.s32.totalorder %s30, 0
      %p165 = por %p163, %p164
      %s166 = ssub.s32 %s31, %s43
      %s167 = ssub.s32 %s32, %s39
      %s168 = sor.u32 %s166, %s167
      %p169 = scmp.eq.s32.totalorder %s168, 0
      %s171 = sadd.s32 %s170, 1
      %s172 = scalar_select %p169, %s170, %s171
      %p175 = pneg %p169
      %p176 = scmp.eq.s32.totalorder %s24, 1
      %p177 = por %p175, %p176
      %p178 = scmp.ne.s32.totalorder %s170, %s173
      %p179 = scmp.eq.s32.totalorder %s24, 0
      %p180 = por %p178, %p179
      %p181 = scmp.ne.s32.totalorder %s170, %s173
      %p182 = scmp.eq.s32.totalorder %s29, 1
      %p183 = por %p181, %p182
      %p184 = scmp.ne.s32.totalorder %s173, %s174
      %p185 = scmp.eq.s32.totalorder %s29, 0
      %p186 = por %p184, %p185
      %p187 = scmp.ne.s32.totalorder %s173, %s174
      %p188 = scmp.eq.s32.totalorder %s30, 1
      %p189 = por %p187, %p188
      %p191 = scmp.ne.s32.totalorder %s174, %s190
      %p192 = scmp.eq.s32.totalorder %s30, 0
      %p193 = por %p191, %p192
      %s194 = ssub.s32 %s31, %s43
      %s195 = ssub.s32 %s32, %s39
      %s196 = sor.u32 %s194, %s195
      %p197 = scmp.eq.s32.totalorder %s196, 0
      %s199 = sadd.s32 %s198, 1
      %s200 = scalar_select %p197, %s198, %s199
      %p203 = pneg %p197
      %p204 = scmp.eq.s32.totalorder %s24, 1
      %p205 = por %p203, %p204
      %p206 = scmp.ne.s32.totalorder %s198, %s201
      %p207 = scmp.eq.s32.totalorder %s24, 0
      %p208 = por %p206, %p207
      %p209 = scmp.ne.s32.totalorder %s198, %s201
      %p210 = scmp.eq.s32.totalorder %s29, 1
      %p211 = por %p209, %p210
      %p212 = scmp.ne.s32.totalorder %s201, %s202
      %p213 = scmp.eq.s32.totalorder %s29, 0
      %p214 = por %p212, %p213
      %p215 = scmp.ne.s32.totalorder %s201, %s202
      %p216 = scmp.eq.s32.totalorder %s30, 1
      %p217 = por %p215, %p216
      %p219 = scmp.ne.s32.totalorder %s202, %s218
      %p220 = scmp.eq.s32.totalorder %s30, 0
      %p221 = por %p219, %p220
      %s222 = ssub.s32 %s31, %s43
      %s223 = ssub.s32 %s32, %s39
      %s224 = sor.u32 %s222, %s223
      %p225 = scmp.eq.s32.totalorder %s224, 0
      %s227 = sadd.s32 %s226, 1
      %s228 = scalar_select %p225, %s226, %s227
      %p231 = pneg %p225
      %p232 = scmp.eq.s32.totalorder %s24, 1
      %p233 = por %p231, %p232
      %p234 = scmp.ne.s32.totalorder %s226, %s229
      %p235 = scmp.eq.s32.totalorder %s24, 0
      %p236 = por %p234, %p235
      %p237 = scmp.ne.s32.totalorder %s226, %s229
      %p238 = scmp.eq.s32.totalorder %s29, 1
      %p239 = por %p237, %p238
      %p240 = scmp.ne.s32.totalorder %s229, %s230
      %p241 = scmp.eq.s32.totalorder %s29, 0
      %p242 = por %p240, %p241
      %p243 = scmp.ne.s32.totalorder %s229, %s230
      %p244 = scmp.eq.s32.totalorder %s30, 1
      %p245 = por %p243, %p244
      %p247 = scmp.ne.s32.totalorder %s230, %s246
      %p248 = scmp.eq.s32.totalorder %s30, 0
      %p249 = por %p247, %p248
      %p250 = scmp.le.s32.totalorder 1, %s24
      %p251 = scmp.lt.s32.totalorder %s24, 3
      %p252 = pnand %p250, %p251
      %p253 = pneg %p252
      // Predicated region
      $region9: #{tpu_custom_call.1} parent=5 // pred_check
        _
      $region10: #{tpu_custom_call.1} parent=5 // pred_check_branch
        %255 = sbr.rel (%p252) target = $region12
      $region11: #{tpu_custom_call.1} parent=5 // pred_region
        %s256 = ssub.s32 %s24, 1
        // Predicated region
        $region13: #{tpu_custom_call.1} parent=11 // pred_check
          %p257 = pneg %p137
        $region14: #{tpu_custom_call.1} parent=11 // pred_check_branch
          %259 = sbr.rel (%p257) target = $region16
        $region15: #{tpu_custom_call.1} parent=11 // pred_region
          %s261 = ssub.s32 3072, 3072
          %262 = vsyncadd [#allocation6], %s261
          %s263 = sshll.u32 [#allocation5], 4
          %s264 = int_to_ptr.vmem [resolvable:$true] %s263
          %269 = dma.hbm_to_vmem [thread:$0]  %s3, 3072, %s264, [#allocation6], 192, 192, 12
        $region16: #{tpu_custom_call.1} parent=11 // pred_fallthru
          _
        // Predicated region
        $region17: #{tpu_custom_call.1} parent=11 // pred_check
          %p270 = pneg %p158
        $region18: #{tpu_custom_call.1} parent=11 // pred_check_branch
          %272 = sbr.rel (%p270) target = $region20
        $region19: #{tpu_custom_call.1} parent=11 // pred_region
          _
        $region20: #{tpu_custom_call.1} parent=11 // pred_fallthru
          _
      $region12: #{tpu_custom_call.1} parent=5 // pred_fallthru
        _
      %p273 = scmp.lt.s32.totalorder %s24, 2
      // Predicated region
      $region21: #{tpu_custom_call.1} parent=5 // pred_check
        %p274 = pneg %p273
      $region22: #{tpu_custom_call.1} parent=5 // pred_check_branch
        %276 = sbr.rel (%p274) target = $region24
      $region23: #{tpu_custom_call.1} parent=5 // pred_region
        // Predicated region
        $region25: #{tpu_custom_call.1} parent=23 // pred_check
          %p277 = pneg %p58
        $region26: #{tpu_custom_call.1} parent=23 // pred_check_branch
          %279 = sbr.rel (%p277) target = $region28
        $region27: #{tpu_custom_call.1} parent=23 // pred_region
          %s280 = sand.u32 %s48, 1
          %s281 = scalar_lea.sflag [#allocation3], %s280
          %s282 = sand.u32 %s48, 1
          %s283 = smul.addr %s282, 256
          %s284 = scalar_lea.vmem [#allocation2], %s283
          %s285 = smul.u32 32, %s32
          %s287 = ssub.s32 4096, 4096
          %288 = vsyncadd %s281, %s287
          %s289 = smul.addr %s31, 32
          %s290 = sadd.s32 %s285, %s289
          %s291 = smul.addr %s290, 128
          %s292 = scalar_lea.hbm %s0, %s291
          %s293 = sshll.u32 %s284, 4
          %s294 = int_to_ptr.vmem [resolvable:$true] %s293
          %299 = dma.hbm_to_vmem [thread:$0]  %s292, 4096, %s294, %s281, 128, 128, 8
        $region28: #{tpu_custom_call.1} parent=23 // pred_fallthru
          _
        // Predicated region
        $region29: #{tpu_custom_call.1} parent=23 // pred_check
          %p300 = pneg %p84
        $region30: #{tpu_custom_call.1} parent=23 // pred_check_branch
          %302 = sbr.rel (%p300) target = $region32
        $region31: #{tpu_custom_call.1} parent=23 // pred_region
          %p303 = scmp.lt.s32.totalorder %s31, 1
          %s304 = scalar_select %p303, %s31, 1
          %s305 = scalar_lea.vmem %s1, %s304
        $region32: #{tpu_custom_call.1} parent=23 // pred_fallthru
          _
        // Predicated region
        $region33: #{tpu_custom_call.1} parent=23 // pred_check
          %p306 = pneg %p110
        $region34: #{tpu_custom_call.1} parent=23 // pred_check_branch
          %308 = sbr.rel (%p306) target = $region36
        $region35: #{tpu_custom_call.1} parent=23 // pred_region
          %p309 = scmp.lt.s32.totalorder %s31, 1
          %s310 = scalar_select %p309, %s31, 1
          %s311 = scalar_lea.vmem %s2, %s310
        $region36: #{tpu_custom_call.1} parent=23 // pred_fallthru
          _
      $region24: #{tpu_custom_call.1} parent=5 // pred_fallthru
        _
      %p312 = scmp.le.s32.totalorder 1, %s24
      %p313 = scmp.lt.s32.totalorder %s24, 3
      %p314 = pnand %p312, %p313
      %p315 = pneg %p314
      // Predicated region
      $region37: #{tpu_custom_call.1} parent=5 // pred_check
        _
      $region38: #{tpu_custom_call.1} parent=5 // pred_check_branch
        %317 = sbr.rel (%p314) target = $region40
      $region39: #{tpu_custom_call.1} parent=5 // pred_region
        %s318 = ssub.s32 %s24, 1
        %s319 = sand.u32 %s51, 1
        %s320 = scalar_lea.sflag [#allocation3], %s319
        %s321 = sand.u32 %s51, 1
        %s322 = smul.addr %s321, 256
        %s323 = scalar_lea.vmem [#allocation2], %s322
        // Predicated region
        $region41: #{tpu_custom_call.1} parent=39 // pred_check
          %p324 = pneg %p64
        $region42: #{tpu_custom_call.1} parent=39 // pred_check_branch
          %326 = sbr.rel (%p324) target = $region44
        $region43: #{tpu_custom_call.1} parent=39 // pred_region
          %327 = dma.done %s320, 4096
        $region44: #{tpu_custom_call.1} parent=39 // pred_fallthru
          _
        // Predicated region
        $region45: #{tpu_custom_call.1} parent=39 // pred_check
          %p328 = pneg %p137
        $region46: #{tpu_custom_call.1} parent=39 // pred_check_branch
          %330 = sbr.rel (%p328) target = $region48
        $region47: #{tpu_custom_call.1} parent=39 // pred_region
          %331 = dma.done [#allocation6], 3072
        $region48: #{tpu_custom_call.1} parent=39 // pred_fallthru
          _
        %s332 = sand.u32 %s51, 1
        %s333 = scalar_lea.sflag [#allocation3], %s332
        %s334 = sand.u32 %s51, 1
        %s335 = smul.addr %s334, 256
        %s336 = scalar_lea.vmem [#allocation2], %s335
        %p337 = pneg %p64
        %p338 = pneg %p61
        %p339 = scmp.lt.s32.totalorder %s33, 1
        %s340 = scalar_select %p339, %s33, 1
        %s341 = scalar_lea.vmem %s1, %s340
        %p342 = pneg %p90
        %p343 = pneg %p87
        %p344 = scmp.lt.s32.totalorder %s33, 1
        %s345 = scalar_select %p344, %s33, 1
        %s346 = scalar_lea.vmem %s2, %s345
        %p347 = pneg %p116
        %p348 = pneg %p113
        %p349 = pneg %p137
        %p350 = pneg %p134
        %p351 = pneg %p158
        %p352 = pneg %p155
        %p353 = pneg %p186
        %p354 = pneg %p183
        %s355 = sand.u32 %s173, 1
        %s356 = scalar_lea.sflag [#allocation4], %s355
        %s357 = sand.u32 %s173, 1
        %s358 = smul.addr %s357, 128
        %s359 = scalar_lea.vmem [#allocation7], %s358
        %p360 = pneg %p214
        %p361 = pneg %p211
        %s362 = sand.u32 %s29, 1
        %s363 = scalar_lea.sflag [#allocation9], %s362
        %s364 = sand.u32 %s201, 1
        %s365 = smul.addr %s364, 128
        %s366 = scalar_lea.vmem [#allocation8], %s365
        %p367 = pneg %p242
        %p368 = pneg %p239
        %s369 = sand.u32 %s29, 1
        %s370 = scalar_lea.sflag [#allocation9], %s369
        %s371 = sand.u32 %s229, 1
        %s372 = smul.addr %s371, 128
        %s373 = scalar_lea.vmem [#allocation10], %s372
        %s374 = smul.u32 32, %s34
        %p375 = scmp.lt.s32.totalorder %s33, 1
        %s376 = scalar_select %p375, %s33, 1
        %s377 = scalar_lea.vmem %s1, %s376
        %p378 = scmp.lt.s32.totalorder %s33, 1
        %s379 = scalar_select %p378, %s33, 1
        %s380 = scalar_lea.vmem %s2, %s379
        %s381 = smul.u32 32, %s34
        %s382 = smul.u32 32, %s34
        %s383 = smul.u32 32, %s34
        %v385 = vld [vmem:[%s323] sm:$0xff]
        %v386 = vld [vmem:[%s323 + $0x8] sm:$0xff]
        %v387 = vld [vmem:[%s323 + $0x10] sm:$0xff]
        %v388 = vld [vmem:[%s323 + $0x18] sm:$0xff]
        %v389 = vld [vmem:[%s323 + $0x20] sm:$0xff]
        %v390 = vld [vmem:[%s323 + $0x28] sm:$0xff]
        %v391 = vld [vmem:[%s323 + $0x30] sm:$0xff]
        %v392 = vld [vmem:[%s323 + $0x38] sm:$0xff]
        %v393 = vld [vmem:[%s323 + $0x40] sm:$0xff]
        %v394 = vld [vmem:[%s323 + $0x48] sm:$0xff]
        %v395 = vld [vmem:[%s323 + $0x50] sm:$0xff]
        %v396 = vld [vmem:[%s323 + $0x58] sm:$0xff]
        %v397 = vld [vmem:[%s323 + $0x60] sm:$0xff]
        %v398 = vld [vmem:[%s323 + $0x68] sm:$0xff]
        %v399 = vld [vmem:[%s323 + $0x70] sm:$0xff]
        %v400 = vld [vmem:[%s323 + $0x78] sm:$0xff]
        %v401 = vld [vmem:[%s323 + $0x80] sm:$0xff]
        %v402 = vld [vmem:[%s323 + $0x88] sm:$0xff]
        %v403 = vld [vmem:[%s323 + $0x90] sm:$0xff]
        %v404 = vld [vmem:[%s323 + $0x98] sm:$0xff]
        %v405 = vld [vmem:[%s323 + $0xa0] sm:$0xff]
        %v406 = vld [vmem:[%s323 + $0xa8] sm:$0xff]
        %v407 = vld [vmem:[%s323 + $0xb0] sm:$0xff]
        %v408 = vld [vmem:[%s323 + $0xb8] sm:$0xff]
        %v409 = vld [vmem:[%s323 + $0xc0] sm:$0xff]
        %v410 = vld [vmem:[%s323 + $0xc8] sm:$0xff]
        %v411 = vld [vmem:[%s323 + $0xd0] sm:$0xff]
        %v412 = vld [vmem:[%s323 + $0xd8] sm:$0xff]
        %v413 = vld [vmem:[%s323 + $0xe0] sm:$0xff]
        %v414 = vld [vmem:[%s323 + $0xe8] sm:$0xff]
        %v415 = vld [vmem:[%s323 + $0xf0] sm:$0xff]
        %v416 = vld [vmem:[%s323 + $0xf8] sm:$0xff]
        %v417 = vld [vmem:[%s377] sm:$0x1]
        %v419 = vlaneseq
        %v420 = vshrl.u32 %v419, 7
        %v421 = vsub.s32 0, %v420
        %v422 = vrot.slane %v417, %v421
        %v424 = vmul.f32 %v385, %v422
        %v425 = vmul.f32 %v386, %v422
        %v426 = vmul.f32 %v387, %v422
        %v427 = vmul.f32 %v388, %v422
        %v428 = vmul.f32 %v389, %v422
        %v429 = vmul.f32 %v390, %v422
        %v430 = vmul.f32 %v391, %v422
        %v431 = vmul.f32 %v392, %v422
        %v432 = vmul.f32 %v393, %v422
        %v433 = vmul.f32 %v394, %v422
        %v434 = vmul.f32 %v395, %v422
        %v435 = vmul.f32 %v396, %v422
        %v436 = vmul.f32 %v397, %v422
        %v437 = vmul.f32 %v398, %v422
        %v438 = vmul.f32 %v399, %v422
        %v439 = vmul.f32 %v400, %v422
        %v440 = vmul.f32 %v401, %v422
        %v441 = vmul.f32 %v402, %v422
        %v442 = vmul.f32 %v403, %v422
        %v443 = vmul.f32 %v404, %v422
        %v444 = vmul.f32 %v405, %v422
        %v445 = vmul.f32 %v406, %v422
        %v446 = vmul.f32 %v407, %v422
        %v447 = vmul.f32 %v408, %v422
        %v448 = vmul.f32 %v409, %v422
        %v449 = vmul.f32 %v410, %v422
        %v450 = vmul.f32 %v411, %v422
        %v451 = vmul.f32 %v412, %v422
        %v452 = vmul.f32 %v413, %v422
        %v453 = vmul.f32 %v414, %v422
        %v454 = vmul.f32 %v415, %v422
        %v455 = vmul.f32 %v416, %v422
        %v456 = vld [vmem:[%s380] sm:$0x1]
        %v458 = vlaneseq
        %v459 = vshrl.u32 %v458, 7
        %v460 = vsub.s32 0, %v459
        %v461 = vrot.slane %v456, %v460
        %v463 = vadd.f32 %v424, %v461
        %v464 = vadd.f32 %v425, %v461
        %v465 = vadd.f32 %v426, %v461
        %v466 = vadd.f32 %v427, %v461
        %v467 = vadd.f32 %v428, %v461
        %v468 = vadd.f32 %v429, %v461
        %v469 = vadd.f32 %v430, %v461
        %v470 = vadd.f32 %v431, %v461
        %v471 = vadd.f32 %v432, %v461
        %v472 = vadd.f32 %v433, %v461
        %v473 = vadd.f32 %v434, %v461
        %v474 = vadd.f32 %v435, %v461
        %v475 = vadd.f32 %v436, %v461
        %v476 = vadd.f32 %v437, %v461
        %v477 = vadd.f32 %v438, %v461
        %v478 = vadd.f32 %v439, %v461
        %v479 = vadd.f32 %v440, %v461
        %v480 = vadd.f32 %v441, %v461
        %v481 = vadd.f32 %v442, %v461
        %v482 = vadd.f32 %v443, %v461
        %v483 = vadd.f32 %v444, %v461
        %v484 = vadd.f32 %v445, %v461
        %v485 = vadd.f32 %v446, %v461
        %v486 = vadd.f32 %v447, %v461
        %v487 = vadd.f32 %v448, %v461
        %v488 = vadd.f32 %v449, %v461
        %v489 = vadd.f32 %v450, %v461
        %v490 = vadd.f32 %v451, %v461
        %v491 = vadd.f32 %v452, %v461
        %v492 = vadd.f32 %v453, %v461
        %v493 = vadd.f32 %v454, %v461
        %v494 = vadd.f32 %v455, %v461
        %v495 = vpack.c.bf16 %v464, %v463
        %v496 = vpack.c.bf16 %v466, %v465
        %v497 = vpack.c.bf16 %v468, %v467
        %v498 = vpack.c.bf16 %v470, %v469
        %v499 = vpack.c.bf16 %v472, %v471
        %v500 = vpack.c.bf16 %v474, %v473
        %v501 = vpack.c.bf16 %v476, %v475
        %v502 = vpack.c.bf16 %v478, %v477
        %v503 = vpack.c.bf16 %v480, %v479
        %v504 = vpack.c.bf16 %v482, %v481
        %v505 = vpack.c.bf16 %v484, %v483
        %v506 = vpack.c.bf16 %v486, %v485
        %v507 = vpack.c.bf16 %v488, %v487
        %v508 = vpack.c.bf16 %v490, %v489
        %v509 = vpack.c.bf16 %v492, %v491
        %v510 = vpack.c.bf16 %v494, %v493
        %v511 = vld [vmem:[#allocation5] sm:$0xf]
        %v512 = vld [vmem:[#allocation5 + $0xc] sm:$0xf]
        %v513 = vld [vmem:[#allocation5 + $0x18] sm:$0xf]
        %v514 = vld [vmem:[#allocation5 + $0x24] sm:$0xf]
        %v515 = vld [vmem:[#allocation5 + $0x30] sm:$0xf]
        %v516 = vld [vmem:[#allocation5 + $0x3c] sm:$0xf]
        %v517 = vld [vmem:[#allocation5 + $0x48] sm:$0xf]
        %v518 = vld [vmem:[#allocation5 + $0x54] sm:$0xf]
        %v519 = vld [vmem:[#allocation5 + $0x60] sm:$0xf]
        %v520 = vld [vmem:[#allocation5 + $0x6c] sm:$0xf]
        %v521 = vld [vmem:[#allocation5 + $0x78] sm:$0xf]
        %v522 = vld [vmem:[#allocation5 + $0x84] sm:$0xf]
        %v523 = vld [vmem:[#allocation5 + $0x90] sm:$0xf]
        %v524 = vld [vmem:[#allocation5 + $0x9c] sm:$0xf]
        %v525 = vld [vmem:[#allocation5 + $0xa8] sm:$0xf]
        %v526 = vld [vmem:[#allocation5 + $0xb4] sm:$0xf]
        %v527 = vld [vmem:[%s4] sm:$0x1]
        %v529 = vlaneseq
        %v530 = vshrl.u32 %v529, 7
        %v531 = vsub.s32 0, %v530
        %v532 = vrot.slane %v527, %v531
        %v550 = vunpack.c.l.b16 %v511
        %v551 = vunpack.c.l.b16 %v512
        %v552 = vunpack.c.l.b16 %v513
        %v553 = vunpack.c.l.b16 %v514
        %v554 = vunpack.c.l.b16 %v515
        %v555 = vunpack.c.l.b16 %v516
        %v556 = vunpack.c.l.b16 %v517
        %v557 = vunpack.c.l.b16 %v518
        %v558 = vunpack.c.l.b16 %v519
        %v559 = vunpack.c.l.b16 %v520
        %v560 = vunpack.c.l.b16 %v521
        %v561 = vunpack.c.l.b16 %v522
        %v562 = vunpack.c.l.b16 %v523
        %v563 = vunpack.c.l.b16 %v524
        %v564 = vunpack.c.l.b16 %v525
        %v565 = vunpack.c.l.b16 %v526
        %v566 = vpack.c.b16 %v551, %v550
        %v567 = vpack.c.b16 %v553, %v552
        %v568 = vpack.c.b16 %v555, %v554
        %v569 = vpack.c.b16 %v557, %v556
        %v570 = vpack.c.b16 %v559, %v558
        %v571 = vpack.c.b16 %v561, %v560
        %v572 = vpack.c.b16 %v563, %v562
        %v573 = vpack.c.b16 %v565, %v564
        %582 = vmatprep.subr.bf16.mxu0 0
        %583 = vmatpush1.bf16.msra.mxu0 %v566
        %584 = vmatprep.subr.bf16.mxu0 0
        %585 = vmatpush1.bf16.msra.mxu0 %v567
        %586 = vmatprep.subr.bf16.mxu0 0
        %587 = vmatpush1.bf16.msra.mxu0 %v568
        %588 = vmatprep.subr.bf16.mxu0 0
        %589 = vmatpush1.bf16.msra.mxu0 %v569
        %590 = vmatprep.subr.bf16.mxu0 0
        %591 = vmatpush1.bf16.msra.mxu0 %v570
        %592 = vmatprep.subr.bf16.mxu0 0
        %593 = vmatpush1.bf16.msra.mxu0 %v571
        %594 = vmatprep.subr.bf16.mxu0 0
        %595 = vmatpush1.bf16.msra.mxu0 %v572
        %596 = vmatprep.subr.bf16.mxu0 0
        %597 = vmatpush1.bf16.msra.mxu0 %v573
        %598 = vmatprep.subr.bf16.mxu0 0
        %599 = vmatpush1.bf16.msra.mxu0 0
        %600 = vmatprep.subr.bf16.mxu0 0
        %601 = vmatpush1.bf16.msra.mxu0 0
        %602 = vmatprep.subr.bf16.mxu0 0
        %603 = vmatpush1.bf16.msra.mxu0 0
        %604 = vmatprep.subr.bf16.mxu0 0
        %605 = vmatpush1.bf16.msra.mxu0 0
        %606 = vmatprep.subr.bf16.mxu0 0
        %607 = vmatpush1.bf16.msra.mxu0 0
        %608 = vmatprep.subr.bf16.mxu0 0
        %609 = vmatpush1.bf16.msra.mxu0 0
        %610 = vmatprep.subr.bf16.mxu0 0
        %611 = vmatpush1.bf16.msra.mxu0 0
        %612 = vmatprep.subr.bf16.mxu0 0
        %613 = vmatpush1.bf16.msra.mxu0 0
        %614 = vmatprep.mubr.bf16.mxu0 0
        %615 = vmatmul.mubr.bf16.gmra.mrb[0].mxu0 %v495
        %v616 = vpop.f32.mrb[0].mxu0
        %v617 = vadd.f32 %v532, %v616
        %v618 = vpop.f32.mrb[0].mxu0
        %v619 = vpop.f32.mrb[0].mxu0
        %v620 = vadd.f32 %v532, %v619
        %v621 = vpop.f32.mrb[0].mxu0
        %622 = vmatprep.mubr.bf16.mxu0 0
        %623 = vmatmul.mubr.bf16.gmra.mrb[0].mxu0 %v496
        %v624 = vpop.f32.mrb[0].mxu0
        %v625 = vadd.f32 %v532, %v624
        %v626 = vpop.f32.mrb[0].mxu0
        %v627 = vpop.f32.mrb[0].mxu0
        %v628 = vadd.f32 %v532, %v627
        %v629 = vpop.f32.mrb[0].mxu0
        %630 = vmatprep.mubr.bf16.mxu0 0
        %631 = vmatmul.mubr.bf16.gmra.mrb[0].mxu0 %v497
        %v632 = vpop.f32.mrb[0].mxu0
        %v633 = vadd.f32 %v532, %v632
        %v634 = vpop.f32.mrb[0].mxu0
        %v635 = vpop.f32.mrb[0].mxu0
        %v636 = vadd.f32 %v532, %v635
        %v637 = vpop.f32.mrb[0].mxu0
        %638 = vmatprep.mubr.bf16.mxu0 0
        %639 = vmatmul.mubr.bf16.gmra.mrb[0].mxu0 %v498
        %v640 = vpop.f32.mrb[0].mxu0
        %v641 = vadd.f32 %v532, %v640
        %v642 = vpop.f32.mrb[0].mxu0
        %v643 = vpop.f32.mrb[0].mxu0
        %v644 = vadd.f32 %v532, %v643
        %v645 = vpop.f32.mrb[0].mxu0
        %646 = vmatprep.mubr.bf16.mxu0 0
        %647 = vmatmul.mubr.bf16.gmra.mrb[0].mxu0 %v499
        %v648 = vpop.f32.mrb[0].mxu0
        %v649 = vadd.f32 %v532, %v648
        %v650 = vpop.f32.mrb[0].mxu0
        %v651 = vpop.f32.mrb[0].mxu0
        %v652 = vadd.f32 %v532, %v651
        %v653 = vpop.f32.mrb[0].mxu0
        %654 = vmatprep.mubr.bf16.mxu0 0
        %655 = vmatmul.mubr.bf16.gmra.mrb[0].mxu0 %v500
        %v656 = vpop.f32.mrb[0].mxu0
        %v657 = vadd.f32 %v532, %v656
        %v658 = vpop.f32.mrb[0].mxu0
        %v659 = vpop.f32.mrb[0].mxu0
        %v660 = vadd.f32 %v532, %v659
        %v661 = vpop.f32.mrb[0].mxu0
        %662 = vmatprep.mubr.bf16.mxu0 0
        %663 = vmatmul.mubr.bf16.gmra.mrb[0].mxu0 %v501
        %v664 = vpop.f32.mrb[0].mxu0
        %v665 = vadd.f32 %v532, %v664
        %v666 = vpop.f32.mrb[0].mxu0
        %v667 = vpop.f32.mrb[0].mxu0
        %v668 = vadd.f32 %v532, %v667
        %v669 = vpop.f32.mrb[0].mxu0
        %670 = vmatprep.mubr.bf16.mxu0 0
        %671 = vmatmul.mubr.bf16.gmra.mrb[0].mxu0 %v502
        %v672 = vpop.f32.mrb[0].mxu0
        %v673 = vadd.f32 %v532, %v672
        %v674 = vpop.f32.mrb[0].mxu0
        %v675 = vpop.f32.mrb[0].mxu0
        %v676 = vadd.f32 %v532, %v675
        %v677 = vpop.f32.mrb[0].mxu0
        %678 = vmatprep.mubr.bf16.mxu0 0
        %679 = vmatmul.mubr.bf16.gmra.mrb[0].mxu0 %v503
        %v680 = vpop.f32.mrb[0].mxu0
        %v681 = vadd.f32 %v532, %v680
        %v682 = vpop.f32.mrb[0].mxu0
        %v683 = vpop.f32.mrb[0].mxu0
        %v684 = vadd.f32 %v532, %v683
        %v685 = vpop.f32.mrb[0].mxu0
        %686 = vmatprep.mubr.bf16.mxu0 0
        %687 = vmatmul.mubr.bf16.gmra.mrb[0].mxu0 %v504
        %v688 = vpop.f32.mrb[0].mxu0
        %v689 = vadd.f32 %v532, %v688
        %v690 = vpop.f32.mrb[0].mxu0
        %v691 = vpop.f32.mrb[0].mxu0
        %v692 = vadd.f32 %v532, %v691
        %v693 = vpop.f32.mrb[0].mxu0
        %694 = vmatprep.mubr.bf16.mxu0 0
        %695 = vmatmul.mubr.bf16.gmra.mrb[0].mxu0 %v505
        %v696 = vpop.f32.mrb[0].mxu0
        %v697 = vadd.f32 %v532, %v696
        %v698 = vpop.f32.mrb[0].mxu0
        %v699 = vpop.f32.mrb[0].mxu0
        %v700 = vadd.f32 %v532, %v699
        %v701 = vpop.f32.mrb[0].mxu0
        %702 = vmatprep.mubr.bf16.mxu0 0
        %703 = vmatmul.mubr.bf16.gmra.mrb[0].mxu0 %v506
        %v704 = vpop.f32.mrb[0].mxu0
        %v705 = vadd.f32 %v532, %v704
        %v706 = vpop.f32.mrb[0].mxu0
        %v707 = vpop.f32.mrb[0].mxu0
        %v708 = vadd.f32 %v532, %v707
        %v709 = vpop.f32.mrb[0].mxu0
        %710 = vmatprep.mubr.bf16.mxu0 0
        %711 = vmatmul.mubr.bf16.gmra.mrb[0].mxu0 %v507
        %v712 = vpop.f32.mrb[0].mxu0
        %v713 = vadd.f32 %v532, %v712
        %v714 = vpop.f32.mrb[0].mxu0
        %v715 = vpop.f32.mrb[0].mxu0
        %v716 = vadd.f32 %v532, %v715
        %v717 = vpop.f32.mrb[0].mxu0
        %718 = vmatprep.mubr.bf16.mxu0 0
        %719 = vmatmul.mubr.bf16.gmra.mrb[0].mxu0 %v508
        %v720 = vpop.f32.mrb[0].mxu0
        %v721 = vadd.f32 %v532, %v720
        %v722 = vpop.f32.mrb[0].mxu0
        %v723 = vpop.f32.mrb[0].mxu0
        %v724 = vadd.f32 %v532, %v723
        %v725 = vpop.f32.mrb[0].mxu0
        %726 = vmatprep.mubr.bf16.mxu0 0
        %727 = vmatmul.mubr.bf16.gmra.mrb[0].mxu0 %v509
        %v728 = vpop.f32.mrb[0].mxu0
        %v729 = vadd.f32 %v532, %v728
        %v730 = vpop.f32.mrb[0].mxu0
        %v731 = vpop.f32.mrb[0].mxu0
        %v732 = vadd.f32 %v532, %v731
        %v733 = vpop.f32.mrb[0].mxu0
        %734 = vmatprep.mubr.bf16.mxu0 0
        %735 = vmatmul.mubr.bf16.gmra.mrb[0].mxu0 %v510
        %v736 = vpop.f32.mrb[0].mxu0
        %v737 = vadd.f32 %v532, %v736
        %v738 = vpop.f32.mrb[0].mxu0
        %v739 = vpop.f32.mrb[0].mxu0
        %v740 = vadd.f32 %v532, %v739
        %v741 = vpop.f32.mrb[0].mxu0
        %742 = vdwg.mxu0
        %v743 = vmul.f32 %v617, 0.5
        %v744 = vmul.f32 %v620, 0.5
        %v745 = vmul.f32 %v625, 0.5
        %v746 = vmul.f32 %v628, 0.5
        %v747 = vmul.f32 %v633, 0.5
        %v748 = vmul.f32 %v636, 0.5
        %v749 = vmul.f32 %v641, 0.5
        %v750 = vmul.f32 %v644, 0.5
        %v751 = vmul.f32 %v649, 0.5
        %v752 = vmul.f32 %v652, 0.5
        %v753 = vmul.f32 %v657, 0.5
        %v754 = vmul.f32 %v660, 0.5
        %v755 = vmul.f32 %v665, 0.5
        %v756 = vmul.f32 %v668, 0.5
        %v757 = vmul.f32 %v673, 0.5
        %v758 = vmul.f32 %v676, 0.5
        %v759 = vmul.f32 %v681, 0.5
        %v760 = vmul.f32 %v684, 0.5
        %v761 = vmul.f32 %v689, 0.5
        %v762 = vmul.f32 %v692, 0.5
        %v763 = vmul.f32 %v697, 0.5
        %v764 = vmul.f32 %v700, 0.5
        %v765 = vmul.f32 %v705, 0.5
        %v766 = vmul.f32 %v708, 0.5
        %v767 = vmul.f32 %v713, 0.5
        %v768 = vmul.f32 %v716, 0.5
        %v769 = vmul.f32 %v721, 0.5
        %v770 = vmul.f32 %v724, 0.5
        %v771 = vmul.f32 %v729, 0.5
        %v772 = vmul.f32 %v732, 0.5
        %v773 = vmul.f32 %v737, 0.5
        %v774 = vmul.f32 %v740, 0.5
        %v775 = vpack.c.bf16 %v744, %v743
        %v776 = vpack.c.bf16 %v746, %v745
        %v777 = vpack.c.bf16 %v748, %v747
        %v778 = vpack.c.bf16 %v750, %v749
        %v779 = vpack.c.bf16 %v752, %v751
        %v780 = vpack.c.bf16 %v754, %v753
        %v781 = vpack.c.bf16 %v756, %v755
        %v782 = vpack.c.bf16 %v758, %v757
        %v783 = vpack.c.bf16 %v760, %v759
        %v784 = vpack.c.bf16 %v762, %v761
        %v785 = vpack.c.bf16 %v764, %v763
        %v786 = vpack.c.bf16 %v766, %v765
        %v787 = vpack.c.bf16 %v768, %v767
        %v788 = vpack.c.bf16 %v770, %v769
        %v789 = vpack.c.bf16 %v772, %v771
        %v790 = vpack.c.bf16 %v774, %v773
        %v807 = vunpack.c.l.b16 %v775
        %v808 = vunpack.c.h.b16 %v775
        %v809 = vunpack.c.l.b16 %v776
        %v810 = vunpack.c.h.b16 %v776
        %v811 = vunpack.c.l.b16 %v777
        %v812 = vunpack.c.h.b16 %v777
        %v813 = vunpack.c.l.b16 %v778
        %v814 = vunpack.c.h.b16 %v778
        %v815 = vunpack.c.l.b16 %v779
        %v816 = vunpack.c.h.b16 %v779
        %v817 = vunpack.c.l.b16 %v780
        %v818 = vunpack.c.h.b16 %v780
        %v819 = vunpack.c.l.b16 %v781
        %v820 = vunpack.c.h.b16 %v781
        %v821 = vunpack.c.l.b16 %v782
        %v822 = vunpack.c.h.b16 %v782
        %v823 = vunpack.c.l.b16 %v783
        %v824 = vunpack.c.h.b16 %v783
        %v825 = vunpack.c.l.b16 %v784
        %v826 = vunpack.c.h.b16 %v784
        %v827 = vunpack.c.l.b16 %v785
        %v828 = vunpack.c.h.b16 %v785
        %v829 = vunpack.c.l.b16 %v786
        %v830 = vunpack.c.h.b16 %v786
        %v831 = vunpack.c.l.b16 %v787
        %v832 = vunpack.c.h.b16 %v787
        %v833 = vunpack.c.l.b16 %v788
        %v834 = vunpack.c.h.b16 %v788
        %v835 = vunpack.c.l.b16 %v789
        %v836 = vunpack.c.h.b16 %v789
        %v837 = vunpack.c.l.b16 %v790
        %v838 = vunpack.c.h.b16 %v790
        %v839 = vpack.c.b16 %v807, %v807
        %v840 = vpack.c.b16 %v808, %v808
        %v841 = vpack.c.b16 %v809, %v809
        %v842 = vpack.c.b16 %v810, %v810
        %v843 = vpack.c.b16 %v811, %v811
        %v844 = vpack.c.b16 %v812, %v812
        %v845 = vpack.c.b16 %v813, %v813
        %v846 = vpack.c.b16 %v814, %v814
        %v847 = vpack.c.b16 %v815, %v815
        %v848 = vpack.c.b16 %v816, %v816
        %v849 = vpack.c.b16 %v817, %v817
        %v850 = vpack.c.b16 %v818, %v818
        %v851 = vpack.c.b16 %v819, %v819
        %v852 = vpack.c.b16 %v820, %v820
        %v853 = vpack.c.b16 %v821, %v821
        %v854 = vpack.c.b16 %v822, %v822
        %v855 = vpack.c.b16 %v823, %v823
        %v856 = vpack.c.b16 %v824, %v824
        %v857 = vpack.c.b16 %v825, %v825
        %v858 = vpack.c.b16 %v826, %v826
        %v859 = vpack.c.b16 %v827, %v827
        %v860 = vpack.c.b16 %v828, %v828
        %v861 = vpack.c.b16 %v829, %v829
        %v862 = vpack.c.b16 %v830, %v830
        %v863 = vpack.c.b16 %v831, %v831
        %v864 = vpack.c.b16 %v832, %v832
        %v865 = vpack.c.b16 %v833, %v833
        %v866 = vpack.c.b16 %v834, %v834
        %v867 = vpack.c.b16 %v835, %v835
        %v868 = vpack.c.b16 %v836, %v836
        %v869 = vpack.c.b16 %v837, %v837
        %v870 = vpack.c.b16 %v838, %v838
        %903 = vst [vmem:[%s359] sm:$0xf] %v839
        %904 = vst [vmem:[%s359 + $0x4] sm:$0xf] %v840
        %905 = vst [vmem:[%s359 + $0x8] sm:$0xf] %v841
        %906 = vst [vmem:[%s359 + $0xc] sm:$0xf] %v842
        %907 = vst [vmem:[%s359 + $0x10] sm:$0xf] %v843
        %908 = vst [vmem:[%s359 + $0x14] sm:$0xf] %v844
        %909 = vst [vmem:[%s359 + $0x18] sm:$0xf] %v845
        %910 = vst [vmem:[%s359 + $0x1c] sm:$0xf] %v846
        %911 = vst [vmem:[%s359 + $0x20] sm:$0xf] %v847
        %912 = vst [vmem:[%s359 + $0x24] sm:$0xf] %v848
        %913 = vst [vmem:[%s359 + $0x28] sm:$0xf] %v849
        %914 = vst [vmem:[%s359 + $0x2c] sm:$0xf] %v850
        %915 = vst [vmem:[%s359 + $0x30] sm:$0xf] %v851
        %916 = vst [vmem:[%s359 + $0x34] sm:$0xf] %v852
        %917 = vst [vmem:[%s359 + $0x38] sm:$0xf] %v853
        %918 = vst [vmem:[%s359 + $0x3c] sm:$0xf] %v854
        %919 = vst [vmem:[%s359 + $0x40] sm:$0xf] %v855
        %920 = vst [vmem:[%s359 + $0x44] sm:$0xf] %v856
        %921 = vst [vmem:[%s359 + $0x48] sm:$0xf] %v857
        %922 = vst [vmem:[%s359 + $0x4c] sm:$0xf] %v858
        %923 = vst [vmem:[%s359 + $0x50] sm:$0xf] %v859
        %924 = vst [vmem:[%s359 + $0x54] sm:$0xf] %v860
        %925 = vst [vmem:[%s359 + $0x58] sm:$0xf] %v861
        %926 = vst [vmem:[%s359 + $0x5c] sm:$0xf] %v862
        %927 = vst [vmem:[%s359 + $0x60] sm:$0xf] %v863
        %928 = vst [vmem:[%s359 + $0x64] sm:$0xf] %v864
        %929 = vst [vmem:[%s359 + $0x68] sm:$0xf] %v865
        %930 = vst [vmem:[%s359 + $0x6c] sm:$0xf] %v866
        %931 = vst [vmem:[%s359 + $0x70] sm:$0xf] %v867
        %932 = vst [vmem:[%s359 + $0x74] sm:$0xf] %v868
        %933 = vst [vmem:[%s359 + $0x78] sm:$0xf] %v869
        %934 = vst [vmem:[%s359 + $0x7c] sm:$0xf] %v870
        %v935 = vld [vmem:[#allocation5 + $0x4] sm:$0xf]
        %v936 = vld [vmem:[#allocation5 + $0x10] sm:$0xf]
        %v937 = vld [vmem:[#allocation5 + $0x1c] sm:$0xf]
        %v938 = vld [vmem:[#allocation5 + $0x28] sm:$0xf]
        %v939 = vld [vmem:[#allocation5 + $0x34] sm:$0xf]
        %v940 = vld [vmem:[#allocation5 + $0x40] sm:$0xf]
        %v941 = vld [vmem:[#allocation5 + $0x4c] sm:$0xf]
        %v942 = vld [vmem:[#allocation5 + $0x58] sm:$0xf]
        %v943 = vld [vmem:[#allocation5 + $0x64] sm:$0xf]
        %v944 = vld [vmem:[#allocation5 + $0x70] sm:$0xf]
        %v945 = vld [vmem:[#allocation5 + $0x7c] sm:$0xf]
        %v946 = vld [vmem:[#allocation5 + $0x88] sm:$0xf]
        %v947 = vld [vmem:[#allocation5 + $0x94] sm:$0xf]
        %v948 = vld [vmem:[#allocation5 + $0xa0] sm:$0xf]
        %v949 = vld [vmem:[#allocation5 + $0xac] sm:$0xf]
        %v950 = vld [vmem:[#allocation5 + $0xb8] sm:$0xf]
        %v951 = vld [vmem:[%s4 + $0x1] sm:$0x1]
        %v953 = vlaneseq
        %v954 = vshrl.u32 %v953, 7
        %v955 = vsub.s32 0, %v954
        %v956 = vrot.slane %v951, %v955
        %v974 = vunpack.c.l.b16 %v935
        %v975 = vunpack.c.l.b16 %v936
        %v976 = vunpack.c.l.b16 %v937
        %v977 = vunpack.c.l.b16 %v938
        %v978 = vunpack.c.l.b16 %v939
        %v979 = vunpack.c.l.b16 %v940
        %v980 = vunpack.c.l.b16 %v941
        %v981 = vunpack.c.l.b16 %v942
        %v982 = vunpack.c.l.b16 %v943
        %v983 = vunpack.c.l.b16 %v944
        %v984 = vunpack.c.l.b16 %v945
        %v985 = vunpack.c.l.b16 %v946
        %v986 = vunpack.c.l.b16 %v947
        %v987 = vunpack.c.l.b16 %v948
        %v988 = vunpack.c.l.b16 %v949
        %v989 = vunpack.c.l.b16 %v950
        %v990 = vpack.c.b16 %v975, %v974
        %v991 = vpack.c.b16 %v977, %v976
        %v992 = vpack.c.b16 %v979, %v978
        %v993 = vpack.c.b16 %v981, %v980
        %v994 = vpack.c.b16 %v983, %v982
        %v995 = vpack.c.b16 %v985, %v984
        %v996 = vpack.c.b16 %v987, %v986
        %v997 = vpack.c.b16 %v989, %v988
        %1006 = vmatprep.subr.bf16.mxu0 0
        %1007 = vmatpush1.bf16.msra.mxu0 %v990
        %1008 = vmatprep.subr.bf16.mxu0 0
        %1009 = vmatpush1.bf16.msra.mxu0 %v991
        %1010 = vmatprep.subr.bf16.mxu0 0
        %1011 = vmatpush1.bf16.msra.mxu0 %v992
        %1012 = vmatprep.subr.bf16.mxu0 0
        %1013 = vmatpush1.bf16.msra.mxu0 %v993
        %1014 = vmatprep.subr.bf16.mxu0 0
        %1015 = vmatpush1.bf16.msra.mxu0 %v994
        %1016 = vmatprep.subr.bf16.mxu0 0
        %1017 = vmatpush1.bf16.msra.mxu0 %v995
        %1018 = vmatprep.subr.bf16.mxu0 0
        %1019 = vmatpush1.bf16.msra.mxu0 %v996
        %1020 = vmatprep.subr.bf16.mxu0 0
        %1021 = vmatpush1.bf16.msra.mxu0 %v997
        %1022 = vmatprep.subr.bf16.mxu0 0
        %1023 = vmatpush1.bf16.msra.mxu0 0
        %1024 = vmatprep.subr.bf16.mxu0 0
        %1025 = vmatpush1.bf16.msra.mxu0 0
        %1026 = vmatprep.subr.bf16.mxu0 0
        %1027 = vmatpush1.bf16.msra.mxu0 0
        %1028 = vmatprep.subr.bf16.mxu0 0
        %1029 = vmatpush1.bf16.msra.mxu0 0
        %1030 = vmatprep.subr.bf16.mxu0 0
        %1031 = vmatpush1.bf16.msra.mxu0 0
        %1032 = vmatprep.subr.bf16.mxu0 0
        %1033 = vmatpush1.bf16.msra.mxu0 0
        %1034 = vmatprep.subr.bf16.mxu0 0
        %1035 = vmatpush1.bf16.msra.mxu0 0
        %1036 = vmatprep.subr.bf16.mxu0 0
        %1037 = vmatpush1.bf16.msra.mxu0 0
        %1038 = vmatprep.mubr.bf16.mxu0 0
        %1039 = vmatmul.mubr.bf16.gmra.mrb[0].mxu0 %v495
        %v1040 = vpop.f32.mrb[0].mxu0
        %v1041 = vadd.f32 %v956, %v1040
        %v1042 = vpop.f32.mrb[0].mxu0
        %v1043 = vpop.f32.mrb[0].mxu0
        %v1044 = vadd.f32 %v956, %v1043
        %v1045 = vpop.f32.mrb[0].mxu0
        %1046 = vmatprep.mubr.bf16.mxu0 0
        %1047 = vmatmul.mubr.bf16.gmra.mrb[0].mxu0 %v496
        %v1048 = vpop.f32.mrb[0].mxu0
        %v1049 = vadd.f32 %v956, %v1048
        %v1050 = vpop.f32.mrb[0].mxu0
        %v1051 = vpop.f32.mrb[0].mxu0
        %v1052 = vadd.f32 %v956, %v1051
        %v1053 = vpop.f32.mrb[0].mxu0
        %1054 = vmatprep.mubr.bf16.mxu0 0
        %1055 = vmatmul.mubr.bf16.gmra.mrb[0].mxu0 %v497
        %v1056 = vpop.f32.mrb[0].mxu0
        %v1057 = vadd.f32 %v956, %v1056
        %v1058 = vpop.f32.mrb[0].mxu0
        %v1059 = vpop.f32.mrb[0].mxu0
        %v1060 = vadd.f32 %v956, %v1059
        %v1061 = vpop.f32.mrb[0].mxu0
        %1062 = vmatprep.mubr.bf16.mxu0 0
        %1063 = vmatmul.mubr.bf16.gmra.mrb[0].mxu0 %v498
        %v1064 = vpop.f32.mrb[0].mxu0
        %v1065 = vadd.f32 %v956, %v1064
        %v1066 = vpop.f32.mrb[0].mxu0
        %v1067 = vpop.f32.mrb[0].mxu0
        %v1068 = vadd.f32 %v956, %v1067
        %v1069 = vpop.f32.mrb[0].mxu0
        %1070 = vmatprep.mubr.bf16.mxu0 0
        %1071 = vmatmul.mubr.bf16.gmra.mrb[0].mxu0 %v499
        %v1072 = vpop.f32.mrb[0].mxu0
        %v1073 = vadd.f32 %v956, %v1072
        %v1074 = vpop.f32.mrb[0].mxu0
        %v1075 = vpop.f32.mrb[0].mxu0
        %v1076 = vadd.f32 %v956, %v1075
        %v1077 = vpop.f32.mrb[0].mxu0
        %1078 = vmatprep.mubr.bf16.mxu0 0
        %1079 = vmatmul.mubr.bf16.gmra.mrb[0].mxu0 %v500
        %v1080 = vpop.f32.mrb[0].mxu0
        %v1081 = vadd.f32 %v956, %v1080
        %v1082 = vpop.f32.mrb[0].mxu0
        %v1083 = vpop.f32.mrb[0].mxu0
        %v1084 = vadd.f32 %v956, %v1083
        %v1085 = vpop.f32.mrb[0].mxu0
        %1086 = vmatprep.mubr.bf16.mxu0 0
        %1087 = vmatmul.mubr.bf16.gmra.mrb[0].mxu0 %v501
        %v1088 = vpop.f32.mrb[0].mxu0
        %v1089 = vadd.f32 %v956, %v1088
        %v1090 = vpop.f32.mrb[0].mxu0
        %v1091 = vpop.f32.mrb[0].mxu0
        %v1092 = vadd.f32 %v956, %v1091
        %v1093 = vpop.f32.mrb[0].mxu0
        %1094 = vmatprep.mubr.bf16.mxu0 0
        %1095 = vmatmul.mubr.bf16.gmra.mrb[0].mxu0 %v502
        %v1096 = vpop.f32.mrb[0].mxu0
        %v1097 = vadd.f32 %v956, %v1096
        %v1098 = vpop.f32.mrb[0].mxu0
        %v1099 = vpop.f32.mrb[0].mxu0
        %v1100 = vadd.f32 %v956, %v1099
        %v1101 = vpop.f32.mrb[0].mxu0
        %1102 = vmatprep.mubr.bf16.mxu0 0
        %1103 = vmatmul.mubr.bf16.gmra.mrb[0].mxu0 %v503
        %v1104 = vpop.f32.mrb[0].mxu0
        %v1105 = vadd.f32 %v956, %v1104
        %v1106 = vpop.f32.mrb[0].mxu0
        %v1107 = vpop.f32.mrb[0].mxu0
        %v1108 = vadd.f32 %v956, %v1107
        %v1109 = vpop.f32.mrb[0].mxu0
        %1110 = vmatprep.mubr.bf16.mxu0 0
        %1111 = vmatmul.mubr.bf16.gmra.mrb[0].mxu0 %v504
        %v1112 = vpop.f32.mrb[0].mxu0
        %v1113 = vadd.f32 %v956, %v1112
        %v1114 = vpop.f32.mrb[0].mxu0
        %v1115 = vpop.f32.mrb[0].mxu0
        %v1116 = vadd.f32 %v956, %v1115
        %v1117 = vpop.f32.mrb[0].mxu0
        %1118 = vmatprep.mubr.bf16.mxu0 0
        %1119 = vmatmul.mubr.bf16.gmra.mrb[0].mxu0 %v505
        %v1120 = vpop.f32.mrb[0].mxu0
        %v1121 = vadd.f32 %v956, %v1120
        %v1122 = vpop.f32.mrb[0].mxu0
        %v1123 = vpop.f32.mrb[0].mxu0
        %v1124 = vadd.f32 %v956, %v1123
        %v1125 = vpop.f32.mrb[0].mxu0
        %1126 = vmatprep.mubr.bf16.mxu0 0
        %1127 = vmatmul.mubr.bf16.gmra.mrb[0].mxu0 %v506
        %v1128 = vpop.f32.mrb[0].mxu0
        %v1129 = vadd.f32 %v956, %v1128
        %v1130 = vpop.f32.mrb[0].mxu0
        %v1131 = vpop.f32.mrb[0].mxu0
        %v1132 = vadd.f32 %v956, %v1131
        %v1133 = vpop.f32.mrb[0].mxu0
        %1134 = vmatprep.mubr.bf16.mxu0 0
        %1135 = vmatmul.mubr.bf16.gmra.mrb[0].mxu0 %v507
        %v1136 = vpop.f32.mrb[0].mxu0
        %v1137 = vadd.f32 %v956, %v1136
        %v1138 = vpop.f32.mrb[0].mxu0
        %v1139 = vpop.f32.mrb[0].mxu0
        %v1140 = vadd.f32 %v956, %v1139
        %v1141 = vpop.f32.mrb[0].mxu0
        %1142 = vmatprep.mubr.bf16.mxu0 0
        %1143 = vmatmul.mubr.bf16.gmra.mrb[0].mxu0 %v508
        %v1144 = vpop.f32.mrb[0].mxu0
        %v1145 = vadd.f32 %v956, %v1144
        %v1146 = vpop.f32.mrb[0].mxu0
        %v1147 = vpop.f32.mrb[0].mxu0
        %v1148 = vadd.f32 %v956, %v1147
        %v1149 = vpop.f32.mrb[0].mxu0
        %1150 = vmatprep.mubr.bf16.mxu0 0
        %1151 = vmatmul.mubr.bf16.gmra.mrb[0].mxu0 %v509
        %v1152 = vpop.f32.mrb[0].mxu0
        %v1153 = vadd.f32 %v956, %v1152
        %v1154 = vpop.f32.mrb[0].mxu0
        %v1155 = vpop.f32.mrb[0].mxu0
        %v1156 = vadd.f32 %v956, %v1155
        %v1157 = vpop.f32.mrb[0].mxu0
        %1158 = vmatprep.mubr.bf16.mxu0 0
        %1159 = vmatmul.mubr.bf16.gmra.mrb[0].mxu0 %v510
        %v1160 = vpop.f32.mrb[0].mxu0
        %v1161 = vadd.f32 %v956, %v1160
        %v1162 = vpop.f32.mrb[0].mxu0
        %v1163 = vpop.f32.mrb[0].mxu0
        %v1164 = vadd.f32 %v956, %v1163
        %v1165 = vpop.f32.mrb[0].mxu0
        %1166 = vdwg.mxu0
        %v1167 = vpack.c.bf16 %v1044, %v1041
        %v1168 = vpack.c.bf16 %v1052, %v1049
        %v1169 = vpack.c.bf16 %v1060, %v1057
        %v1170 = vpack.c.bf16 %v1068, %v1065
        %v1171 = vpack.c.bf16 %v1076, %v1073
        %v1172 = vpack.c.bf16 %v1084, %v1081
        %v1173 = vpack.c.bf16 %v1092, %v1089
        %v1174 = vpack.c.bf16 %v1100, %v1097
        %v1175 = vpack.c.bf16 %v1108, %v1105
        %v1176 = vpack.c.bf16 %v1116, %v1113
        %v1177 = vpack.c.bf16 %v1124, %v1121
        %v1178 = vpack.c.bf16 %v1132, %v1129
        %v1179 = vpack.c.bf16 %v1140, %v1137
        %v1180 = vpack.c.bf16 %v1148, %v1145
        %v1181 = vpack.c.bf16 %v1156, %v1153
        %v1182 = vpack.c.bf16 %v1164, %v1161
        %v1199 = vunpack.c.l.b16 %v1167
        %v1200 = vunpack.c.h.b16 %v1167
        %v1201 = vunpack.c.l.b16 %v1168
        %v1202 = vunpack.c.h.b16 %v1168
        %v1203 = vunpack.c.l.b16 %v1169
        %v1204 = vunpack.c.h.b16 %v1169
        %v1205 = vunpack.c.l.b16 %v1170
        %v1206 = vunpack.c.h.b16 %v1170
        %v1207 = vunpack.c.l.b16 %v1171
        %v1208 = vunpack.c.h.b16 %v1171
        %v1209 = vunpack.c.l.b16 %v1172
        %v1210 = vunpack.c.h.b16 %v1172
        %v1211 = vunpack.c.l.b16 %v1173
        %v1212 = vunpack.c.h.b16 %v1173
        %v1213 = vunpack.c.l.b16 %v1174
        %v1214 = vunpack.c.h.b16 %v1174
        %v1215 = vunpack.c.l.b16 %v1175
        %v1216 = vunpack.c.h.b16 %v1175
        %v1217 = vunpack.c.l.b16 %v1176
        %v1218 = vunpack.c.h.b16 %v1176
        %v1219 = vunpack.c.l.b16 %v1177
        %v1220 = vunpack.c.h.b16 %v1177
        %v1221 = vunpack.c.l.b16 %v1178
        %v1222 = vunpack.c.h.b16 %v1178
        %v1223 = vunpack.c.l.b16 %v1179
        %v1224 = vunpack.c.h.b16 %v1179
        %v1225 = vunpack.c.l.b16 %v1180
        %v1226 = vunpack.c.h.b16 %v1180
        %v1227 = vunpack.c.l.b16 %v1181
        %v1228 = vunpack.c.h.b16 %v1181
        %v1229 = vunpack.c.l.b16 %v1182
        %v1230 = vunpack.c.h.b16 %v1182
        %v1231 = vpack.c.b16 %v1199, %v1199
        %v1232 = vpack.c.b16 %v1200, %v1200
        %v1233 = vpack.c.b16 %v1201, %v1201
        %v1234 = vpack.c.b16 %v1202, %v1202
        %v1235 = vpack.c.b16 %v1203, %v1203
        %v1236 = vpack.c.b16 %v1204, %v1204
        %v1237 = vpack.c.b16 %v1205, %v1205
        %v1238 = vpack.c.b16 %v1206, %v1206
        %v1239 = vpack.c.b16 %v1207, %v1207
        %v1240 = vpack.c.b16 %v1208, %v1208
        %v1241 = vpack.c.b16 %v1209, %v1209
        %v1242 = vpack.c.b16 %v1210, %v1210
        %v1243 = vpack.c.b16 %v1211, %v1211
        %v1244 = vpack.c.b16 %v1212, %v1212
        %v1245 = vpack.c.b16 %v1213, %v1213
        %v1246 = vpack.c.b16 %v1214, %v1214
        %v1247 = vpack.c.b16 %v1215, %v1215
        %v1248 = vpack.c.b16 %v1216, %v1216
        %v1249 = vpack.c.b16 %v1217, %v1217
        %v1250 = vpack.c.b16 %v1218, %v1218
        %v1251 = vpack.c.b16 %v1219, %v1219
        %v1252 = vpack.c.b16 %v1220, %v1220
        %v1253 = vpack.c.b16 %v1221, %v1221
        %v1254 = vpack.c.b16 %v1222, %v1222
        %v1255 = vpack.c.b16 %v1223, %v1223
        %v1256 = vpack.c.b16 %v1224, %v1224
        %v1257 = vpack.c.b16 %v1225, %v1225
        %v1258 = vpack.c.b16 %v1226, %v1226
        %v1259 = vpack.c.b16 %v1227, %v1227
        %v1260 = vpack.c.b16 %v1228, %v1228
        %v1261 = vpack.c.b16 %v1229, %v1229
        %v1262 = vpack.c.b16 %v1230, %v1230
        %1295 = vst [vmem:[%s366] sm:$0xf] %v1231
        %1296 = vst [vmem:[%s366 + $0x4] sm:$0xf] %v1232
        %1297 = vst [vmem:[%s366 + $0x8] sm:$0xf] %v1233
        %1298 = vst [vmem:[%s366 + $0xc] sm:$0xf] %v1234
        %1299 = vst [vmem:[%s366 + $0x10] sm:$0xf] %v1235
        %1300 = vst [vmem:[%s366 + $0x14] sm:$0xf] %v1236
        %1301 = vst [vmem:[%s366 + $0x18] sm:$0xf] %v1237
        %1302 = vst [vmem:[%s366 + $0x1c] sm:$0xf] %v1238
        %1303 = vst [vmem:[%s366 + $0x20] sm:$0xf] %v1239
        %1304 = vst [vmem:[%s366 + $0x24] sm:$0xf] %v1240
        %1305 = vst [vmem:[%s366 + $0x28] sm:$0xf] %v1241
        %1306 = vst [vmem:[%s366 + $0x2c] sm:$0xf] %v1242
        %1307 = vst [vmem:[%s366 + $0x30] sm:$0xf] %v1243
        %1308 = vst [vmem:[%s366 + $0x34] sm:$0xf] %v1244
        %1309 = vst [vmem:[%s366 + $0x38] sm:$0xf] %v1245
        %1310 = vst [vmem:[%s366 + $0x3c] sm:$0xf] %v1246
        %1311 = vst [vmem:[%s366 + $0x40] sm:$0xf] %v1247
        %1312 = vst [vmem:[%s366 + $0x44] sm:$0xf] %v1248
        %1313 = vst [vmem:[%s366 + $0x48] sm:$0xf] %v1249
        %1314 = vst [vmem:[%s366 + $0x4c] sm:$0xf] %v1250
        %1315 = vst [vmem:[%s366 + $0x50] sm:$0xf] %v1251
        %1316 = vst [vmem:[%s366 + $0x54] sm:$0xf] %v1252
        %1317 = vst [vmem:[%s366 + $0x58] sm:$0xf] %v1253
        %1318 = vst [vmem:[%s366 + $0x5c] sm:$0xf] %v1254
        %1319 = vst [vmem:[%s366 + $0x60] sm:$0xf] %v1255
        %1320 = vst [vmem:[%s366 + $0x64] sm:$0xf] %v1256
        %1321 = vst [vmem:[%s366 + $0x68] sm:$0xf] %v1257
        %1322 = vst [vmem:[%s366 + $0x6c] sm:$0xf] %v1258
        %1323 = vst [vmem:[%s366 + $0x70] sm:$0xf] %v1259
        %1324 = vst [vmem:[%s366 + $0x74] sm:$0xf] %v1260
        %1325 = vst [vmem:[%s366 + $0x78] sm:$0xf] %v1261
        %1326 = vst [vmem:[%s366 + $0x7c] sm:$0xf] %v1262
        %v1327 = vld [vmem:[#allocation5 + $0x8] sm:$0xf]
        %v1328 = vld [vmem:[#allocation5 + $0x14] sm:$0xf]
        %v1329 = vld [vmem:[#allocation5 + $0x20] sm:$0xf]
        %v1330 = vld [vmem:[#allocation5 + $0x2c] sm:$0xf]
        %v1331 = vld [vmem:[#allocation5 + $0x38] sm:$0xf]
        %v1332 = vld [vmem:[#allocation5 + $0x44] sm:$0xf]
        %v1333 = vld [vmem:[#allocation5 + $0x50] sm:$0xf]
        %v1334 = vld [vmem:[#allocation5 + $0x5c] sm:$0xf]
        %v1335 = vld [vmem:[#allocation5 + $0x68] sm:$0xf]
        %v1336 = vld [vmem:[#allocation5 + $0x74] sm:$0xf]
        %v1337 = vld [vmem:[#allocation5 + $0x80] sm:$0xf]
        %v1338 = vld [vmem:[#allocation5 + $0x8c] sm:$0xf]
        %v1339 = vld [vmem:[#allocation5 + $0x98] sm:$0xf]
        %v1340 = vld [vmem:[#allocation5 + $0xa4] sm:$0xf]
        %v1341 = vld [vmem:[#allocation5 + $0xb0] sm:$0xf]
        %v1342 = vld [vmem:[#allocation5 + $0xbc] sm:$0xf]
        %v1343 = vld [vmem:[%s4 + $0x2] sm:$0x1]
        %v1345 = vlaneseq
        %v1346 = vshrl.u32 %v1345, 7
        %v1347 = vsub.s32 0, %v1346
        %v1348 = vrot.slane %v1343, %v1347
        %v1366 = vunpack.c.l.b16 %v1327
        %v1367 = vunpack.c.l.b16 %v1328
        %v1368 = vunpack.c.l.b16 %v1329
        %v1369 = vunpack.c.l.b16 %v1330
        %v1370 = vunpack.c.l.b16 %v1331
        %v1371 = vunpack.c.l.b16 %v1332
        %v1372 = vunpack.c.l.b16 %v1333
        %v1373 = vunpack.c.l.b16 %v1334
        %v1374 = vunpack.c.l.b16 %v1335
        %v1375 = vunpack.c.l.b16 %v1336
        %v1376 = vunpack.c.l.b16 %v1337
        %v1377 = vunpack.c.l.b16 %v1338
        %v1378 = vunpack.c.l.b16 %v1339
        %v1379 = vunpack.c.l.b16 %v1340
        %v1380 = vunpack.c.l.b16 %v1341
        %v1381 = vunpack.c.l.b16 %v1342
        %v1382 = vpack.c.b16 %v1367, %v1366
        %v1383 = vpack.c.b16 %v1369, %v1368
        %v1384 = vpack.c.b16 %v1371, %v1370
        %v1385 = vpack.c.b16 %v1373, %v1372
        %v1386 = vpack.c.b16 %v1375, %v1374
        %v1387 = vpack.c.b16 %v1377, %v1376
        %v1388 = vpack.c.b16 %v1379, %v1378
        %v1389 = vpack.c.b16 %v1381, %v1380
        %1398 = vmatprep.subr.bf16.mxu0 0
        %1399 = vmatpush1.bf16.msra.mxu0 %v1382
        %1400 = vmatprep.subr.bf16.mxu0 0
        %1401 = vmatpush1.bf16.msra.mxu0 %v1383
        %1402 = vmatprep.subr.bf16.mxu0 0
        %1403 = vmatpush1.bf16.msra.mxu0 %v1384
        %1404 = vmatprep.subr.bf16.mxu0 0
        %1405 = vmatpush1.bf16.msra.mxu0 %v1385
        %1406 = vmatprep.subr.bf16.mxu0 0
        %1407 = vmatpush1.bf16.msra.mxu0 %v1386
        %1408 = vmatprep.subr.bf16.mxu0 0
        %1409 = vmatpush1.bf16.msra.mxu0 %v1387
        %1410 = vmatprep.subr.bf16.mxu0 0
        %1411 = vmatpush1.bf16.msra.mxu0 %v1388
        %1412 = vmatprep.subr.bf16.mxu0 0
        %1413 = vmatpush1.bf16.msra.mxu0 %v1389
        %1414 = vmatprep.subr.bf16.mxu0 0
        %1415 = vmatpush1.bf16.msra.mxu0 0
        %1416 = vmatprep.subr.bf16.mxu0 0
        %1417 = vmatpush1.bf16.msra.mxu0 0
        %1418 = vmatprep.subr.bf16.mxu0 0
        %1419 = vmatpush1.bf16.msra.mxu0 0
        %1420 = vmatprep.subr.bf16.mxu0 0
        %1421 = vmatpush1.bf16.msra.mxu0 0
        %1422 = vmatprep.subr.bf16.mxu0 0
        %1423 = vmatpush1.bf16.msra.mxu0 0
        %1424 = vmatprep.subr.bf16.mxu0 0
        %1425 = vmatpush1.bf16.msra.mxu0 0
        %1426 = vmatprep.subr.bf16.mxu0 0
        %1427 = vmatpush1.bf16.msra.mxu0 0
        %1428 = vmatprep.subr.bf16.mxu0 0
        %1429 = vmatpush1.bf16.msra.mxu0 0
        %1430 = vmatprep.mubr.bf16.mxu0 0
        %1431 = vmatmul.mubr.bf16.gmra.mrb[0].mxu0 %v495
        %v1432 = vpop.f32.mrb[0].mxu0
        %v1433 = vadd.f32 %v1348, %v1432
        %v1434 = vpop.f32.mrb[0].mxu0
        %v1435 = vpop.f32.mrb[0].mxu0
        %v1436 = vadd.f32 %v1348, %v1435
        %v1437 = vpop.f32.mrb[0].mxu0
        %1438 = vmatprep.mubr.bf16.mxu0 0
        %1439 = vmatmul.mubr.bf16.gmra.mrb[0].mxu0 %v496
        %v1440 = vpop.f32.mrb[0].mxu0
        %v1441 = vadd.f32 %v1348, %v1440
        %v1442 = vpop.f32.mrb[0].mxu0
        %v1443 = vpop.f32.mrb[0].mxu0
        %v1444 = vadd.f32 %v1348, %v1443
        %v1445 = vpop.f32.mrb[0].mxu0
        %1446 = vmatprep.mubr.bf16.mxu0 0
        %1447 = vmatmul.mubr.bf16.gmra.mrb[0].mxu0 %v497
        %v1448 = vpop.f32.mrb[0].mxu0
        %v1449 = vadd.f32 %v1348, %v1448
        %v1450 = vpop.f32.mrb[0].mxu0
        %v1451 = vpop.f32.mrb[0].mxu0
        %v1452 = vadd.f32 %v1348, %v1451
        %v1453 = vpop.f32.mrb[0].mxu0
        %1454 = vmatprep.mubr.bf16.mxu0 0
        %1455 = vmatmul.mubr.bf16.gmra.mrb[0].mxu0 %v498
        %v1456 = vpop.f32.mrb[0].mxu0
        %v1457 = vadd.f32 %v1348, %v1456
        %v1458 = vpop.f32.mrb[0].mxu0
        %v1459 = vpop.f32.mrb[0].mxu0
        %v1460 = vadd.f32 %v1348, %v1459
        %v1461 = vpop.f32.mrb[0].mxu0
        %1462 = vmatprep.mubr.bf16.mxu0 0
        %1463 = vmatmul.mubr.bf16.gmra.mrb[0].mxu0 %v499
        %v1464 = vpop.f32.mrb[0].mxu0
        %v1465 = vadd.f32 %v1348, %v1464
        %v1466 = vpop.f32.mrb[0].mxu0
        %v1467 = vpop.f32.mrb[0].mxu0
        %v1468 = vadd.f32 %v1348, %v1467
        %v1469 = vpop.f32.mrb[0].mxu0
        %1470 = vmatprep.mubr.bf16.mxu0 0
        %1471 = vmatmul.mubr.bf16.gmra.mrb[0].mxu0 %v500
        %v1472 = vpop.f32.mrb[0].mxu0
        %v1473 = vadd.f32 %v1348, %v1472
        %v1474 = vpop.f32.mrb[0].mxu0
        %v1475 = vpop.f32.mrb[0].mxu0
        %v1476 = vadd.f32 %v1348, %v1475
        %v1477 = vpop.f32.mrb[0].mxu0
        %1478 = vmatprep.mubr.bf16.mxu0 0
        %1479 = vmatmul.mubr.bf16.gmra.mrb[0].mxu0 %v501
        %v1480 = vpop.f32.mrb[0].mxu0
        %v1481 = vadd.f32 %v1348, %v1480
        %v1482 = vpop.f32.mrb[0].mxu0
        %v1483 = vpop.f32.mrb[0].mxu0
        %v1484 = vadd.f32 %v1348, %v1483
        %v1485 = vpop.f32.mrb[0].mxu0
        %1486 = vmatprep.mubr.bf16.mxu0 0
        %1487 = vmatmul.mubr.bf16.gmra.mrb[0].mxu0 %v502
        %v1488 = vpop.f32.mrb[0].mxu0
        %v1489 = vadd.f32 %v1348, %v1488
        %v1490 = vpop.f32.mrb[0].mxu0
        %v1491 = vpop.f32.mrb[0].mxu0
        %v1492 = vadd.f32 %v1348, %v1491
        %v1493 = vpop.f32.mrb[0].mxu0
        %1494 = vmatprep.mubr.bf16.mxu0 0
        %1495 = vmatmul.mubr.bf16.gmra.mrb[0].mxu0 %v503
        %v1496 = vpop.f32.mrb[0].mxu0
        %v1497 = vadd.f32 %v1348, %v1496
        %v1498 = vpop.f32.mrb[0].mxu0
        %v1499 = vpop.f32.mrb[0].mxu0
        %v1500 = vadd.f32 %v1348, %v1499
        %v1501 = vpop.f32.mrb[0].mxu0
        %1502 = vmatprep.mubr.bf16.mxu0 0
        %1503 = vmatmul.mubr.bf16.gmra.mrb[0].mxu0 %v504
        %v1504 = vpop.f32.mrb[0].mxu0
        %v1505 = vadd.f32 %v1348, %v1504
        %v1506 = vpop.f32.mrb[0].mxu0
        %v1507 = vpop.f32.mrb[0].mxu0
        %v1508 = vadd.f32 %v1348, %v1507
        %v1509 = vpop.f32.mrb[0].mxu0
        %1510 = vmatprep.mubr.bf16.mxu0 0
        %1511 = vmatmul.mubr.bf16.gmra.mrb[0].mxu0 %v505
        %v1512 = vpop.f32.mrb[0].mxu0
        %v1513 = vadd.f32 %v1348, %v1512
        %v1514 = vpop.f32.mrb[0].mxu0
        %v1515 = vpop.f32.mrb[0].mxu0
        %v1516 = vadd.f32 %v1348, %v1515
        %v1517 = vpop.f32.mrb[0].mxu0
        %1518 = vmatprep.mubr.bf16.mxu0 0
        %1519 = vmatmul.mubr.bf16.gmra.mrb[0].mxu0 %v506
        %v1520 = vpop.f32.mrb[0].mxu0
        %v1521 = vadd.f32 %v1348, %v1520
        %v1522 = vpop.f32.mrb[0].mxu0
        %v1523 = vpop.f32.mrb[0].mxu0
        %v1524 = vadd.f32 %v1348, %v1523
        %v1525 = vpop.f32.mrb[0].mxu0
        %1526 = vmatprep.mubr.bf16.mxu0 0
        %1527 = vmatmul.mubr.bf16.gmra.mrb[0].mxu0 %v507
        %v1528 = vpop.f32.mrb[0].mxu0
        %v1529 = vadd.f32 %v1348, %v1528
        %v1530 = vpop.f32.mrb[0].mxu0
        %v1531 = vpop.f32.mrb[0].mxu0
        %v1532 = vadd.f32 %v1348, %v1531
        %v1533 = vpop.f32.mrb[0].mxu0
        %1534 = vmatprep.mubr.bf16.mxu0 0
        %1535 = vmatmul.mubr.bf16.gmra.mrb[0].mxu0 %v508
        %v1536 = vpop.f32.mrb[0].mxu0
        %v1537 = vadd.f32 %v1348, %v1536
        %v1538 = vpop.f32.mrb[0].mxu0
        %v1539 = vpop.f32.mrb[0].mxu0
        %v1540 = vadd.f32 %v1348, %v1539
        %v1541 = vpop.f32.mrb[0].mxu0
        %1542 = vmatprep.mubr.bf16.mxu0 0
        %1543 = vmatmul.mubr.bf16.gmra.mrb[0].mxu0 %v509
        %v1544 = vpop.f32.mrb[0].mxu0
        %v1545 = vadd.f32 %v1348, %v1544
        %v1546 = vpop.f32.mrb[0].mxu0
        %v1547 = vpop.f32.mrb[0].mxu0
        %v1548 = vadd.f32 %v1348, %v1547
        %v1549 = vpop.f32.mrb[0].mxu0
        %1550 = vmatprep.mubr.bf16.mxu0 0
        %1551 = vmatmul.mubr.bf16.gmra.mrb[0].mxu0 %v510
        %v1552 = vpop.f32.mrb[0].mxu0
        %v1553 = vadd.f32 %v1348, %v1552
        %v1554 = vpop.f32.mrb[0].mxu0
        %v1555 = vpop.f32.mrb[0].mxu0
        %v1556 = vadd.f32 %v1348, %v1555
        %v1557 = vpop.f32.mrb[0].mxu0
        %1558 = vdwg.mxu0
        %v1559 = vpack.c.bf16 %v1436, %v1433
        %v1560 = vpack.c.bf16 %v1444, %v1441
        %v1561 = vpack.c.bf16 %v1452, %v1449
        %v1562 = vpack.c.bf16 %v1460, %v1457
        %v1563 = vpack.c.bf16 %v1468, %v1465
        %v1564 = vpack.c.bf16 %v1476, %v1473
        %v1565 = vpack.c.bf16 %v1484, %v1481
        %v1566 = vpack.c.bf16 %v1492, %v1489
        %v1567 = vpack.c.bf16 %v1500, %v1497
        %v1568 = vpack.c.bf16 %v1508, %v1505
        %v1569 = vpack.c.bf16 %v1516, %v1513
        %v1570 = vpack.c.bf16 %v1524, %v1521
        %v1571 = vpack.c.bf16 %v1532, %v1529
        %v1572 = vpack.c.bf16 %v1540, %v1537
        %v1573 = vpack.c.bf16 %v1548, %v1545
        %v1574 = vpack.c.bf16 %v1556, %v1553
        %v1591 = vunpack.c.l.b16 %v1559
        %v1592 = vunpack.c.h.b16 %v1559
        %v1593 = vunpack.c.l.b16 %v1560
        %v1594 = vunpack.c.h.b16 %v1560
        %v1595 = vunpack.c.l.b16 %v1561
        %v1596 = vunpack.c.h.b16 %v1561
        %v1597 = vunpack.c.l.b16 %v1562
        %v1598 = vunpack.c.h.b16 %v1562
        %v1599 = vunpack.c.l.b16 %v1563
        %v1600 = vunpack.c.h.b16 %v1563
        %v1601 = vunpack.c.l.b16 %v1564
        %v1602 = vunpack.c.h.b16 %v1564
        %v1603 = vunpack.c.l.b16 %v1565
        %v1604 = vunpack.c.h.b16 %v1565
        %v1605 = vunpack.c.l.b16 %v1566
        %v1606 = vunpack.c.h.b16 %v1566
        %v1607 = vunpack.c.l.b16 %v1567
        %v1608 = vunpack.c.h.b16 %v1567
        %v1609 = vunpack.c.l.b16 %v1568
        %v1610 = vunpack.c.h.b16 %v1568
        %v1611 = vunpack.c.l.b16 %v1569
        %v1612 = vunpack.c.h.b16 %v1569
        %v1613 = vunpack.c.l.b16 %v1570
        %v1614 = vunpack.c.h.b16 %v1570
        %v1615 = vunpack.c.l.b16 %v1571
        %v1616 = vunpack.c.h.b16 %v1571
        %v1617 = vunpack.c.l.b16 %v1572
        %v1618 = vunpack.c.h.b16 %v1572
        %v1619 = vunpack.c.l.b16 %v1573
        %v1620 = vunpack.c.h.b16 %v1573
        %v1621 = vunpack.c.l.b16 %v1574
        %v1622 = vunpack.c.h.b16 %v1574
        %v1623 = vpack.c.b16 %v1591, %v1591
        %v1624 = vpack.c.b16 %v1592, %v1592
        %v1625 = vpack.c.b16 %v1593, %v1593
        %v1626 = vpack.c.b16 %v1594, %v1594
        %v1627 = vpack.c.b16 %v1595, %v1595
        %v1628 = vpack.c.b16 %v1596, %v1596
        %v1629 = vpack.c.b16 %v1597, %v1597
        %v1630 = vpack.c.b16 %v1598, %v1598
        %v1631 = vpack.c.b16 %v1599, %v1599
        %v1632 = vpack.c.b16 %v1600, %v1600
        %v1633 = vpack.c.b16 %v1601, %v1601
        %v1634 = vpack.c.b16 %v1602, %v1602
        %v1635 = vpack.c.b16 %v1603, %v1603
        %v1636 = vpack.c.b16 %v1604, %v1604
        %v1637 = vpack.c.b16 %v1605, %v1605
        %v1638 = vpack.c.b16 %v1606, %v1606
        %v1639 = vpack.c.b16 %v1607, %v1607
        %v1640 = vpack.c.b16 %v1608, %v1608
        %v1641 = vpack.c.b16 %v1609, %v1609
        %v1642 = vpack.c.b16 %v1610, %v1610
        %v1643 = vpack.c.b16 %v1611, %v1611
        %v1644 = vpack.c.b16 %v1612, %v1612
        %v1645 = vpack.c.b16 %v1613, %v1613
        %v1646 = vpack.c.b16 %v1614, %v1614
        %v1647 = vpack.c.b16 %v1615, %v1615
        %v1648 = vpack.c.b16 %v1616, %v1616
        %v1649 = vpack.c.b16 %v1617, %v1617
        %v1650 = vpack.c.b16 %v1618, %v1618
        %v1651 = vpack.c.b16 %v1619, %v1619
        %v1652 = vpack.c.b16 %v1620, %v1620
        %v1653 = vpack.c.b16 %v1621, %v1621
        %v1654 = vpack.c.b16 %v1622, %v1622
        %1687 = vst [vmem:[%s373] sm:$0xf] %v1623
        %1688 = vst [vmem:[%s373 + $0x4] sm:$0xf] %v1624
        %1689 = vst [vmem:[%s373 + $0x8] sm:$0xf] %v1625
        %1690 = vst [vmem:[%s373 + $0xc] sm:$0xf] %v1626
        %1691 = vst [vmem:[%s373 + $0x10] sm:$0xf] %v1627
        %1692 = vst [vmem:[%s373 + $0x14] sm:$0xf] %v1628
        %1693 = vst [vmem:[%s373 + $0x18] sm:$0xf] %v1629
        %1694 = vst [vmem:[%s373 + $0x1c] sm:$0xf] %v1630
        %1695 = vst [vmem:[%s373 + $0x20] sm:$0xf] %v1631
        %1696 = vst [vmem:[%s373 + $0x24] sm:$0xf] %v1632
        %1697 = vst [vmem:[%s373 + $0x28] sm:$0xf] %v1633
        %1698 = vst [vmem:[%s373 + $0x2c] sm:$0xf] %v1634
        %1699 = vst [vmem:[%s373 + $0x30] sm:$0xf] %v1635
        %1700 = vst [vmem:[%s373 + $0x34] sm:$0xf] %v1636
        %1701 = vst [vmem:[%s373 + $0x38] sm:$0xf] %v1637
        %1702 = vst [vmem:[%s373 + $0x3c] sm:$0xf] %v1638
        %1703 = vst [vmem:[%s373 + $0x40] sm:$0xf] %v1639
        %1704 = vst [vmem:[%s373 + $0x44] sm:$0xf] %v1640
        %1705 = vst [vmem:[%s373 + $0x48] sm:$0xf] %v1641
        %1706 = vst [vmem:[%s373 + $0x4c] sm:$0xf] %v1642
        %1707 = vst [vmem:[%s373 + $0x50] sm:$0xf] %v1643
        %1708 = vst [vmem:[%s373 + $0x54] sm:$0xf] %v1644
        %1709 = vst [vmem:[%s373 + $0x58] sm:$0xf] %v1645
        %1710 = vst [vmem:[%s373 + $0x5c] sm:$0xf] %v1646
        %1711 = vst [vmem:[%s373 + $0x60] sm:$0xf] %v1647
        %1712 = vst [vmem:[%s373 + $0x64] sm:$0xf] %v1648
        %1713 = vst [vmem:[%s373 + $0x68] sm:$0xf] %v1649
        %1714 = vst [vmem:[%s373 + $0x6c] sm:$0xf] %v1650
        %1715 = vst [vmem:[%s373 + $0x70] sm:$0xf] %v1651
        %1716 = vst [vmem:[%s373 + $0x74] sm:$0xf] %v1652
        %1717 = vst [vmem:[%s373 + $0x78] sm:$0xf] %v1653
        %1718 = vst [vmem:[%s373 + $0x7c] sm:$0xf] %v1654
        %s1719 = sand.u32 %s173, 1
        %s1720 = scalar_lea.sflag [#allocation4], %s1719
        %s1721 = sand.u32 %s173, 1
        %s1722 = smul.addr %s1721, 128
        %s1723 = scalar_lea.vmem [#allocation7], %s1722
        %s1724 = sand.u32 %s29, 1
        %s1725 = scalar_lea.sflag [#allocation9], %s1724
        %s1726 = sand.u32 %s201, 1
        %s1727 = smul.addr %s1726, 128
        %s1728 = scalar_lea.vmem [#allocation8], %s1727
        %s1729 = sand.u32 %s29, 1
        %s1730 = scalar_lea.sflag [#allocation9], %s1729
        %s1731 = sand.u32 %s229, 1
        %s1732 = smul.addr %s1731, 128
        %s1733 = scalar_lea.vmem [#allocation10], %s1732
        // Predicated region
        $region49: #{tpu_custom_call.1} parent=39 // pred_check
          %p1734 = pneg %p183
        $region50: #{tpu_custom_call.1} parent=39 // pred_check_branch
          %1736 = sbr.rel (%p1734) target = $region52
        $region51: #{tpu_custom_call.1} parent=39 // pred_region
          %s1737 = smul.u32 32, %s34
          %s1739 = ssub.s32 2048, 2048
          %1740 = vsyncadd %s1720, %s1739
          %s1741 = smul.addr %s33, 32
          %s1742 = sadd.s32 %s1737, %s1741
          %s1743 = smul.addr %s1742, 64
          %s1744 = scalar_lea.hbm %s5, %s1743
          %s1745 = sshll.u32 %s1723, 4
          %s1746 = int_to_ptr.vmem [resolvable:$true] %s1745
          %1751 = dma.vmem_to_hbm [thread:$0]  %s1746, 2048, %s1744, %s1720, 64, 64, 4
        $region52: #{tpu_custom_call.1} parent=39 // pred_fallthru
          _
        // Predicated region
        $region53: #{tpu_custom_call.1} parent=39 // pred_check
          %p1752 = pneg %p211
        $region54: #{tpu_custom_call.1} parent=39 // pred_check_branch
          %1754 = sbr.rel (%p1752) target = $region56
        $region55: #{tpu_custom_call.1} parent=39 // pred_region
          %s1755 = smul.u32 32, %s34
          %s1757 = ssub.s32 2048, 2048
          %1758 = vsyncadd %s1725, %s1757
          %s1759 = smul.addr %s33, 32
          %s1760 = sadd.s32 %s1755, %s1759
          %s1761 = smul.addr %s1760, 64
          %s1762 = scalar_lea.hbm %s6, %s1761
          %s1763 = sshll.u32 %s1728, 4
          %s1764 = int_to_ptr.vmem [resolvable:$true] %s1763
          %1769 = dma.vmem_to_hbm [thread:$0]  %s1764, 2048, %s1762, %s1725, 64, 64, 4
        $region56: #{tpu_custom_call.1} parent=39 // pred_fallthru
          _
        // Predicated region
        $region57: #{tpu_custom_call.1} parent=39 // pred_check
          %p1770 = pneg %p239
        $region58: #{tpu_custom_call.1} parent=39 // pred_check_branch
          %1772 = sbr.rel (%p1770) target = $region60
        $region59: #{tpu_custom_call.1} parent=39 // pred_region
          %s1773 = smul.u32 32, %s34
          %s1775 = ssub.s32 2048, 2048
          %1776 = vsyncadd %s1730, %s1775
          %s1777 = smul.addr %s33, 32
          %s1778 = sadd.s32 %s1773, %s1777
          %s1779 = smul.addr %s1778, 64
          %s1780 = scalar_lea.hbm %s7, %s1779
          %s1781 = sshll.u32 %s1733, 4
          %s1782 = int_to_ptr.vmem [resolvable:$true] %s1781
          %1787 = dma.vmem_to_hbm [thread:$0]  %s1782, 2048, %s1780, %s1730, 64, 64, 4
        $region60: #{tpu_custom_call.1} parent=39 // pred_fallthru
          _
      $region40: #{tpu_custom_call.1} parent=5 // pred_fallthru
        _
      %p1788 = scmp.le.s32.totalorder 2, %s24
      // Predicated region
      $region61: #{tpu_custom_call.1} parent=5 // pred_check
        %p1789 = pneg %p1788
      $region62: #{tpu_custom_call.1} parent=5 // pred_check_branch
        %1791 = sbr.rel (%p1789) target = $region64
      $region63: #{tpu_custom_call.1} parent=5 // pred_region
        %s1792 = ssub.s32 %s24, 2
        // Predicated region
        $region65: #{tpu_custom_call.1} parent=63 // pred_check
          %p1793 = pneg %p189
        $region66: #{tpu_custom_call.1} parent=63 // pred_check_branch
          %1795 = sbr.rel (%p1793) target = $region68
        $region67: #{tpu_custom_call.1} parent=63 // pred_region
          %s1796 = sand.u32 %s174, 1
          %s1797 = scalar_lea.sflag [#allocation4], %s1796
          %s1798 = sand.u32 %s174, 1
          %s1799 = smul.addr %s1798, 128
          %s1800 = scalar_lea.vmem [#allocation7], %s1799
          %1801 = dma.done %s1797, 2048
        $region68: #{tpu_custom_call.1} parent=63 // pred_fallthru
          _
        // Predicated region
        $region69: #{tpu_custom_call.1} parent=63 // pred_check
          %p1802 = pneg %p217
        $region70: #{tpu_custom_call.1} parent=63 // pred_check_branch
          %1804 = sbr.rel (%p1802) target = $region72
        $region71: #{tpu_custom_call.1} parent=63 // pred_region
          %s1805 = sand.u32 %s30, 1
          %s1806 = scalar_lea.sflag [#allocation9], %s1805
          %s1807 = sand.u32 %s202, 1
          %s1808 = smul.addr %s1807, 128
          %s1809 = scalar_lea.vmem [#allocation8], %s1808
          %1810 = dma.done %s1806, 2048
        $region72: #{tpu_custom_call.1} parent=63 // pred_fallthru
          _
        // Predicated region
        $region73: #{tpu_custom_call.1} parent=63 // pred_check
          %p1811 = pneg %p245
        $region74: #{tpu_custom_call.1} parent=63 // pred_check_branch
          %1813 = sbr.rel (%p1811) target = $region76
        $region75: #{tpu_custom_call.1} parent=63 // pred_region
          %s1814 = sand.u32 %s30, 1
          %s1815 = scalar_lea.sflag [#allocation9], %s1814
          %s1816 = sand.u32 %s230, 1
          %s1817 = smul.addr %s1816, 128
          %s1818 = scalar_lea.vmem [#allocation10], %s1817
          %1819 = dma.done %s1815, 2048
        $region76: #{tpu_custom_call.1} parent=63 // pred_fallthru
          _
      $region64: #{tpu_custom_call.1} parent=5 // pred_fallthru
        _
    $region6: #{tpu_custom_call.1} parent=1 // loop_footer
      %s28 = sadd.s32 1, %s24
    $region7: #{tpu_custom_call.1} parent=1 // loop_footer_branch
      %23 = sbr.rel target = $region3
    $region8: #{tpu_custom_call.1} parent=1 // loop_exit
      _
    %1820 = vsyncpa [#allocation3], 1
    %s1821 = scalar_lea.sflag [#allocation3], 1
    %1822 = vsyncpa %s1821, 1
    %1823 = vsyncpa [#allocation6], 1
    %1824 = vsyncpa [#allocation4], 1
    %s1825 = scalar_lea.sflag [#allocation4], 1
    %1826 = vsyncpa %s1825, 1
    %1827 = vsyncpa [#allocation9], 1
    %s1828 = scalar_lea.sflag [#allocation9], 1
    %1829 = vsyncpa %s1828, 1

</llo_original>
